<compile_context>
chip_gen: v7x
topology: tpu7x:2x2x1
jax: 0.10.0
libtpu: 0.0.40
codegen_flags: <defaults>
</compile_context>

<pallas_src>
import jax
import jax.numpy as jnp
from jax.experimental import pallas as pl
from jax.experimental.pallas import tpu as pltpu


def value_head_kernel(x_ref, w1_ref, b1_ref, w2_ref, b2_ref, w3_ref, b3_ref,
                      o_ref, acc_ref):
    """Grid = (k_tiles, batch_tiles), K outer.

    fc1 is K-tiled into acc_ref[i] (f32, one slab per batch tile); because K is
    the outer axis, the W1 tile for a given k is fetched once and reused across
    all batch tiles.  fc2/fc3 + both relus run on the last K step.
    """
    k = pl.program_id(0)
    i = pl.program_id(1)
    tm = acc_ref.shape[1]

    @pl.when(k == 0)
    def _():
        acc_ref[i] = jnp.zeros(acc_ref.shape[1:], acc_ref.dtype)

    # fc1 partial: bf16 x bf16 -> f32 accumulate (MXU native path).
    acc_ref[i] += jnp.dot(x_ref[...], w1_ref[...],
                          preferred_element_type=jnp.float32)

    @pl.when(k == pl.num_programs(0) - 1)
    def _():
        h1 = jnp.maximum(acc_ref[i] + b1_ref[...], 0.0)          # relu, f32
        h2 = jnp.dot(h1.astype(jnp.bfloat16), w2_ref[...],
                     preferred_element_type=jnp.float32) + b2_ref[...]
        h2 = jnp.maximum(h2, 0.0)                                 # relu, f32
        # fc3 (out_features = 1): VPU multiply + cross-lane sum (XLU slot),
        # avoids a wasted N=1 MXU push.
        v = jnp.sum(h2 * w3_ref[...], axis=-1, keepdims=True) + b3_ref[...]
        row0 = pl.multiple_of(i * tm, tm)
        o_ref[pl.ds(row0, tm), :] = v.astype(o_ref.dtype)


def _round_up(x, m):
    return ((x + m - 1) // m) * m


def prepare_value_head_params(params, *, max_tk=4096):
    """One-time weight prep (do this at init, not per forward call).

    params = (w1, b1, w2, b2, w3, b3) with weights stored (in, out):
      w1: (flat_dim, 512)  b1: (1, 512)
      w2: (512, 128)       b2: (1, 128)
      w3: (128, 1)         b3: (1, 1)
    Casts the streamed weights to bf16 and zero-pads W1's K dim to the K tile.
    """
    w1, b1, w2, b2, w3, b3 = params
    flat_dim, n1 = w1.shape
    n2 = w2.shape[1]

    tk = min(max_tk, _round_up(flat_dim, 128))
    kp = _round_up(flat_dim, tk)

    w1_b = w1.astype(jnp.bfloat16)
    if kp != flat_dim:
        w1_b = jnp.zeros((kp, n1), jnp.bfloat16).at[:flat_dim, :].set(w1_b)

    return {
        "w1": w1_b,                                        # (kp, 512) bf16
        "b1": jnp.asarray(b1, jnp.float32).reshape(1, n1),
        "w2": w2.astype(jnp.bfloat16),                     # (512, 128) bf16
        "b2": jnp.asarray(b2, jnp.float32).reshape(1, n2),
        "w3_row": jnp.asarray(w3, jnp.float32).reshape(1, n2),
        "b3": jnp.asarray(b3, jnp.float32).reshape(1, 1),
        "flat_dim": flat_dim,
        "tk": tk,
    }


def value_network_forward(yconv, prepared):
    """yconv: (B, 64, Hc, Wc) float32 — output of the (external) common_cnn.
    prepared: output of prepare_value_head_params()."""
    B = yconv.shape[0]
    flat_dim = prepared["flat_dim"]
    assert yconv.shape[1] * yconv.shape[2] * yconv.shape[3] == flat_dim

    w1, b1 = prepared["w1"], prepared["b1"]
    w2, b2 = prepared["w2"], prepared["b2"]
    w3_row, b3 = prepared["w3_row"], prepared["b3"]
    tk = prepared["tk"]
    kp, n1 = w1.shape                  # padded flat_dim, 512
    n2 = w2.shape[1]                   # 128

    # Batch tile: multiple of 16 (bf16 sublane packing), capped at 256 so a
    # single tile fills the 256-wide MXU on v6e/v7x.
    tm = min(256, _round_up(max(B, 1), 16))
    bp = _round_up(B, tm)
    nb = bp // tm
    nk = kp // tk

    # glue: same row-major flatten as PyTorch `yconv.view(-1, 64*Hc*Wc)`.
    x_flat = yconv.reshape(B, flat_dim).astype(jnp.bfloat16)
    if bp != B or kp != flat_dim:
        x_p = jnp.zeros((bp, kp), jnp.bfloat16).at[:B, :flat_dim].set(x_flat)
    else:
        x_p = x_flat

    # VMEM budget: double-buffered x + W1 tiles, resident small weights,
    # full-batch fc1 accumulator, resident output block, + headroom.
    vmem_bytes = (2 * tm * tk * 2            # x tiles (bf16, double-buffered)
                  + 2 * tk * n1 * 2          # W1 tiles (bf16, double-buffered)
                  + n1 * n2 * 2              # W2 resident (bf16)
                  + nb * tm * n1 * 4         # fc1 accumulator scratch (f32)
                  + bp * 4                   # resident output block
                  + 4 * (n1 + 2 * n2 + 1))   # biases / w3 row
    vmem_limit = min(48 << 20, max(32 << 20, vmem_bytes + (8 << 20)))

    out = pl.pallas_call(
        value_head_kernel,
        out_shape=jax.ShapeDtypeStruct((bp, 1), jnp.float32),
        grid_spec=pltpu.PrefetchScalarGridSpec(
            num_scalar_prefetch=0,
            grid=(nk, nb),   # K outer: each W1 tile DMA'd once, reused over batch tiles
            in_specs=[
                pl.BlockSpec((tm, tk), lambda k, i: (i, k)),   # x
                pl.BlockSpec((tk, n1), lambda k, i: (k, 0)),   # W1 (streamed once over K)
                pl.BlockSpec((1, n1), lambda k, i: (0, 0)),    # b1 (resident)
                pl.BlockSpec((n1, n2), lambda k, i: (0, 0)),   # W2 (resident)
                pl.BlockSpec((1, n2), lambda k, i: (0, 0)),    # b2
                pl.BlockSpec((1, n2), lambda k, i: (0, 0)),    # w3 row
                pl.BlockSpec((1, 1), lambda k, i: (0, 0)),     # b3
            ],
            # Output block is resident across the whole grid; each batch tile
            # writes its rows on the last K step and HBM writeback happens once.
            out_specs=pl.BlockSpec((bp, 1), lambda k, i: (0, 0)),
            scratch_shapes=[pltpu.VMEM((nb, tm, n1), jnp.float32)],
        ),
        compiler_params=pltpu.CompilerParams(
            # K is a reduction (sequential); the batch axis writes into the
            # shared resident output block, so it also stays on one core.  For
            # the small-B inference case the second v7x core would be idle
            # anyway — weight residency (see TODO) is the real lever there.
            dimension_semantics=("arbitrary", "arbitrary"),
            vmem_limit_bytes=vmem_limit,
        ),
    )(x_p, w1, b1, w2, b2, w3_row, b3)

    return out[:B]


def init_linear_params(key, fan_in, fan_out):
    """torch.nn.Linear default init: U(-1/sqrt(fan_in), 1/sqrt(fan_in)).
    Returned W is (in, out) so x @ W == torch's x @ W_t.T."""
    kw, kb = jax.random.split(key)
    bound = 1.0 / jnp.sqrt(jnp.float32(fan_in))
    w = jax.random.uniform(kw, (fan_in, fan_out), jnp.float32, -bound, bound)
    b = jax.random.uniform(kb, (1, fan_out), jnp.float32, -bound, bound)
    return w, b


if __name__ == "__main__":
    key = jax.random.PRNGKey(0)

    # Small shapes consistent with the module: common_cnn output (B, 64, Hc, Wc).
    B, C, Hc, Wc = 2, 64, 4, 4
    flat_dim = C * Hc * Wc            # 1024
    fc1_size, fc2_size, fc3_size = 512, 128, 1

    kx, k1, k2, k3 = jax.random.split(key, 4)
    yconv = jax.random.normal(kx, (B, C, Hc, Wc), jnp.float32)

    w1, b1 = init_linear_params(k1, flat_dim, fc1_size)
    w2, b2 = init_linear_params(k2, fc1_size, fc2_size)
    w3, b3 = init_linear_params(k3, fc2_size, fc3_size)
    params = (w1, b1, w2, b2, w3, b3)

    # One-time weight prep (bf16 cast / K pad) — outside the per-call path.
    prepared = prepare_value_head_params(params)

    out = jax.block_until_ready(value_network_forward(yconv, prepared))
    assert out.shape == (B, 1), out.shape

    # Reference in plain JAX (full f32) — bf16 weight/activation streaming
    # gives ~1e-3 level deviation, so use a loosened tolerance.
    x_flat = yconv.reshape(B, flat_dim)
    ref = jnp.maximum(x_flat @ w1 + b1, 0.0)
    ref = jnp.maximum(ref @ w2 + b2, 0.0)
    ref = ref @ w3 + b3
    assert jnp.allclose(out, ref, atol=2e-2, rtol=2e-2), (out, ref)

    print("KERNEL_OK")
</pallas_src>

<mosaic_0001>
module attributes {stable_mosaic.version = 11 : i64} {
  func.func @value_head_kernel(%arg0: i32, %arg1: i32, %arg2: memref<16x1024xbf16, #tpu.memory_space<vmem>>, %arg3: memref<1024x512xbf16, #tpu.memory_space<vmem>>, %arg4: memref<1x512xf32, #tpu.memory_space<vmem>>, %arg5: memref<512x128xbf16, #tpu.memory_space<vmem>>, %arg6: memref<1x128xf32, #tpu.memory_space<vmem>>, %arg7: memref<1x128xf32, #tpu.memory_space<vmem>>, %arg8: memref<1x1xf32, #tpu.memory_space<vmem>>, %arg9: memref<16x1xf32, #tpu.memory_space<vmem>>, %arg10: memref<1x16x512xf32, #tpu.memory_space<vmem>>) attributes {dimension_semantics = [#tpu.dimension_semantics<arbitrary>, #tpu.dimension_semantics<arbitrary>], iteration_bounds = array<i64: 1, 1>, scalar_prefetch = 0 : i64, scratch_operands = 1 : i64, tpu.core_type = #tpu.core_type<tc>, window_params = [{transform_indices = @transform_0, window_bounds = array<i64: 16, 1024>}, {transform_indices = @transform_1, window_bounds = array<i64: 1024, 512>}, {pipeline_mode = #tpu.pipeline_mode<synchronous>, transform_indices = @transform_2, window_bounds = array<i64: 1, 512>}, {pipeline_mode = #tpu.pipeline_mode<synchronous>, transform_indices = @transform_3, window_bounds = array<i64: 512, 128>}, {pipeline_mode = #tpu.pipeline_mode<synchronous>, transform_indices = @transform_4, window_bounds = array<i64: 1, 128>}, {pipeline_mode = #tpu.pipeline_mode<synchronous>, transform_indices = @transform_5, window_bounds = array<i64: 1, 128>}, {pipeline_mode = #tpu.pipeline_mode<synchronous>, transform_indices = @transform_6, window_bounds = array<i64: 1, 1>}, {pipeline_mode = #tpu.pipeline_mode<synchronous>, transform_indices = @transform_7, window_bounds = array<i64: 16, 1>}]} {
    %c0_i32 = arith.constant 0 : i32
    %0 = arith.cmpi eq, %arg0, %c0_i32 : i32
    %1 = arith.extui %0 : i1 to i32
    %c0_i32_0 = arith.constant 0 : i32
    %2 = arith.cmpi ne, %1, %c0_i32_0 : i32
    scf.if %2 {
      %cst_10 = arith.constant 0.000000e+00 : f32
      %17 = vector.broadcast %cst_10 : f32 to vector<16x512xf32>
      %18 = arith.index_cast %arg1 : i32 to index
      %c0_11 = arith.constant 0 : index
      %c0_12 = arith.constant 0 : index
      %19 = vector.load %arg10[%18, %c0_11, %c0_12] : memref<1x16x512xf32, #tpu.memory_space<vmem>>, vector<1x16x512xf32>
      %20 = vector.shape_cast %19 : vector<1x16x512xf32> to vector<16x512xf32>
      %21 = vector.shape_cast %17 : vector<16x512xf32> to vector<1x16x512xf32>
      tpu.vector_store %arg10[%18, %c0_11, %c0_12], %21 {strides = array<i32>} : memref<1x16x512xf32, #tpu.memory_space<vmem>>, vector<1x16x512xf32>,
    } else {
    }
    %3 = arith.index_cast %arg1 : i32 to index
    %c0 = arith.constant 0 : index
    %c0_1 = arith.constant 0 : index
    %4 = vector.load %arg10[%3, %c0, %c0_1] : memref<1x16x512xf32, #tpu.memory_space<vmem>>, vector<1x16x512xf32>
    %5 = vector.shape_cast %4 : vector<1x16x512xf32> to vector<16x512xf32>
    %c0_2 = arith.constant 0 : index
    %c0_3 = arith.constant 0 : index
    %6 = vector.load %arg2[%c0_2, %c0_3] : memref<16x1024xbf16, #tpu.memory_space<vmem>>, vector<16x1024xbf16>
    %c0_4 = arith.constant 0 : index
    %c0_5 = arith.constant 0 : index
    %7 = vector.load %arg3[%c0_4, %c0_5] : memref<1024x512xbf16, #tpu.memory_space<vmem>>, vector<1024x512xbf16>
    %cst = arith.constant dense<0.000000e+00> : vector<16x512xf32>
    %8 = tpu.matmul %6, %7, %cst {dimension_numbers = #tpu.dot_dimension_numbers<[1], [0], [0], [1], [0, 0, 1, 1], [], []>} : vector<16x1024xbf16>, vector<1024x512xbf16>, vector<16x512xf32> -> vector<16x512xf32>
    %9 = arith.addf %5, %8 : vector<16x512xf32>
    %10 = arith.index_cast %arg1 : i32 to index
    %c0_6 = arith.constant 0 : index
    %c0_7 = arith.constant 0 : index
    %11 = vector.load %arg10[%10, %c0_6, %c0_7] : memref<1x16x512xf32, #tpu.memory_space<vmem>>, vector<1x16x512xf32>
    %12 = vector.shape_cast %11 : vector<1x16x512xf32> to vector<16x512xf32>
    %13 = vector.shape_cast %9 : vector<16x512xf32> to vector<1x16x512xf32>
    tpu.vector_store %arg10[%10, %c0_6, %c0_7], %13 {strides = array<i32>} : memref<1x16x512xf32, #tpu.memory_space<vmem>>, vector<1x16x512xf32>,
    %c0_i32_8 = arith.constant 0 : i32
    %14 = arith.cmpi eq, %arg0, %c0_i32_8 : i32
    %15 = arith.extui %14 : i1 to i32
    %c0_i32_9 = arith.constant 0 : i32
    %16 = arith.cmpi ne, %15, %c0_i32_9 : i32
    scf.if %16 {
      %17 = arith.index_cast %arg1 : i32 to index
      %c0_10 = arith.constant 0 : index
      %c0_11 = arith.constant 0 : index
      %18 = vector.load %arg10[%17, %c0_10, %c0_11] : memref<1x16x512xf32, #tpu.memory_space<vmem>>, vector<1x16x512xf32>
      %19 = vector.shape_cast %18 : vector<1x16x512xf32> to vector<16x512xf32>
      %c0_12 = arith.constant 0 : index
      %c0_13 = arith.constant 0 : index
      %20 = vector.load %arg4[%c0_12, %c0_13] : memref<1x512xf32, #tpu.memory_space<vmem>>, vector<1x512xf32>
      %21 = vector.broadcast %20 : vector<1x512xf32> to vector<16x512xf32>
      %22 = arith.addf %19, %21 : vector<16x512xf32>
      %cst_14 = arith.constant 0.000000e+00 : f32
      %23 = vector.broadcast %cst_14 : f32 to vector<16x512xf32>
      %24 = arith.maximumf %22, %23 : vector<16x512xf32>
      %25 = arith.truncf %24 : vector<16x512xf32> to vector<16x512xbf16>
      %c0_15 = arith.constant 0 : index
      %c0_16 = arith.constant 0 : index
      %26 = vector.load %arg5[%c0_15, %c0_16] : memref<512x128xbf16, #tpu.memory_space<vmem>>, vector<512x128xbf16>
      %cst_17 = arith.constant dense<0.000000e+00> : vector<16x128xf32>
      %27 = tpu.matmul %25, %26, %cst_17 {dimension_numbers = #tpu.dot_dimension_numbers<[1], [0], [0], [1], [0, 0, 1, 1], [], []>} : vector<16x512xbf16>, vector<512x128xbf16>, vector<16x128xf32> -> vector<16x128xf32>
      %c0_18 = arith.constant 0 : index
      %c0_19 = arith.constant 0 : index
      %28 = vector.load %arg6[%c0_18, %c0_19] : memref<1x128xf32, #tpu.memory_space<vmem>>, vector<1x128xf32>
      %29 = vector.broadcast %28 : vector<1x128xf32> to vector<16x128xf32>
      %30 = arith.addf %27, %29 : vector<16x128xf32>
      %cst_20 = arith.constant 0.000000e+00 : f32
      %31 = vector.broadcast %cst_20 : f32 to vector<16x128xf32>
      %32 = arith.maximumf %30, %31 : vector<16x128xf32>
      %c0_21 = arith.constant 0 : index
      %c0_22 = arith.constant 0 : index
      %33 = vector.load %arg7[%c0_21, %c0_22] : memref<1x128xf32, #tpu.memory_space<vmem>>, vector<1x128xf32>
      %34 = vector.broadcast %33 : vector<1x128xf32> to vector<16x128xf32>
      %35 = arith.mulf %32, %34 : vector<16x128xf32>
      %cst_23 = arith.constant dense<0.000000e+00> : vector<16xf32>
      %36 = vector.multi_reduction <add>, %35, %cst_23 [1] : vector<16x128xf32> to vector<16xf32>
      %37 = vector.shape_cast %36 : vector<16xf32> to vector<16x1xf32>
      %c0_24 = arith.constant 0 : index
      %c0_25 = arith.constant 0 : index
      %38 = vector.load %arg8[%c0_24, %c0_25] : memref<1x1xf32, #tpu.memory_space<vmem>>, vector<1x1xf32>
      %39 = vector.broadcast %38 : vector<1x1xf32> to vector<16x1xf32>
      %40 = arith.addf %37, %39 : vector<16x1xf32>
      %c16_i32 = arith.constant 16 : i32
      %41 = arith.muli %arg1, %c16_i32 : i32
      %42 = tpu.assume_multiple %41, 16 : i32
      %43 = arith.index_cast %42 : i32 to index
      %c0_26 = arith.constant 0 : index
      %44 = vector.load %arg9[%43, %c0_26] : memref<16x1xf32, #tpu.memory_space<vmem>>, vector<16x1xf32>
      tpu.vector_store %arg9[%43, %c0_26], %40 {strides = array<i32>} : memref<16x1xf32, #tpu.memory_space<vmem>>, vector<16x1xf32>,
    } else {
    }
    return
  }
  func.func @transform_0(%arg0: i32, %arg1: i32) -> (i32, i32) {
    %c0_i32 = arith.constant 0 : i32
    return %arg1, %arg0 : i32, i32
  }
  func.func @transform_1(%arg0: i32, %arg1: i32) -> (i32, i32) {
    %c0_i32 = arith.constant 0 : i32
    %c0_i32_0 = arith.constant 0 : i32
    return %arg0, %c0_i32 : i32, i32
  }
  func.func @transform_2(%arg0: i32, %arg1: i32) -> (i32, i32) {
    %c0_i32 = arith.constant 0 : i32
    %c0_i32_0 = arith.constant 0 : i32
    %c0_i32_1 = arith.constant 0 : i32
    return %c0_i32, %c0_i32_0 : i32, i32
  }
  func.func @transform_3(%arg0: i32, %arg1: i32) -> (i32, i32) {
    %c0_i32 = arith.constant 0 : i32
    %c0_i32_0 = arith.constant 0 : i32
    %c0_i32_1 = arith.constant 0 : i32
    return %c0_i32, %c0_i32_0 : i32, i32
  }
  func.func @transform_4(%arg0: i32, %arg1: i32) -> (i32, i32) {
    %c0_i32 = arith.constant 0 : i32
    %c0_i32_0 = arith.constant 0 : i32
    %c0_i32_1 = arith.constant 0 : i32
    return %c0_i32, %c0_i32_0 : i32, i32
  }
  func.func @transform_5(%arg0: i32, %arg1: i32) -> (i32, i32) {
    %c0_i32 = arith.constant 0 : i32
    %c0_i32_0 = arith.constant 0 : i32
    %c0_i32_1 = arith.constant 0 : i32
    return %c0_i32, %c0_i32_0 : i32, i32
  }
  func.func @transform_6(%arg0: i32, %arg1: i32) -> (i32, i32) {
    %c0_i32 = arith.constant 0 : i32
    %c0_i32_0 = arith.constant 0 : i32
    %c0_i32_1 = arith.constant 0 : i32
    return %c0_i32, %c0_i32_0 : i32, i32
  }
  func.func @transform_7(%arg0: i32, %arg1: i32) -> (i32, i32) {
    %c0_i32 = arith.constant 0 : i32
    %c0_i32_0 = arith.constant 0 : i32
    %c0_i32_1 = arith.constant 0 : i32
    return %c0_i32, %c0_i32_0 : i32, i32
  }
}

</mosaic_0001>

<llo_original>
// kernel: tpu_custom_call.1
$region0: #{tpu_custom_call.1}
  #allocation0 [shape = 'u32[]', space=smem, size = 0x4, offset = 0x4, fixed_abs, tag = 'smem constant byte address 0x4 - core index']
  #allocation1 [shape = 'u32[144,128]{1,0:T(1,128)}', space=vmem, size = 0x12000, scoped, tag = 'internal scratch']
  #allocation2 [shape = 'f32[1,16,512]{2,1,0:T(8,128)}', space=vmem, size = 0x8000, scoped, tag = 'scratch operand']
  #allocation3 [shape = 'f32[1,1]{1,0:T(1,128)S(1)}', space=vmem, size = 0x200, scoped, tag = 'scoped memory for tpu_custom_call.1']
  %s0 = inlined_call_operand.hbm [shape: bf16[16,1024], index: 0, kind: input, shape index: {}]
  %s1 = inlined_call_operand.hbm [shape: bf16[1024,512], index: 1, kind: input, shape index: {}]
  %s2 = inlined_call_operand.vmem [shape: f32[1,512], index: 2, kind: input, shape index: {}]
  %s3 = inlined_call_operand.hbm [shape: bf16[512,128], index: 3, kind: input, shape index: {}]
  %s4 = inlined_call_operand.vmem [shape: f32[1,128], index: 4, kind: input, shape index: {}]
  %s5 = inlined_call_operand.vmem [shape: f32[1,128], index: 5, kind: input, shape index: {}]
  %s6 = inlined_call_operand.<no memory space> [shape: f32[1,1], index: 6, kind: input, shape index: {}]
  %s7 = inlined_call_operand.vmem [shape: f32[16,1], index: 7, kind: output, shape index: {}]
  %s8 = sld [smem:[#allocation0]]
  $region58: #{tpu_custom_call.1} parent=0
    _
  %s10 = ssub.s32 1, %s8
  %s11 = scalar_select 0, %s10, %s8
  %v12 = vstv %s6
  %13 = vst [vmem:[#allocation3] sm:$0x1] %v12
  $region1: #{tpu_custom_call.1} parent=0
    #allocation4 [shape = 'u8[32768]{0}', space=vmem, size = 0x8000, scoped, tag = 'input window, operand 0, single buffered']
    #allocation5 [shape = 's32[1]{0}', space=sflag, size = 0x4, scoped, tag = 'scoped memory for tpu_custom_call.1']
    #allocation6 [shape = 'u8[1048576]{0}', space=vmem, size = 0x100000, scoped, tag = 'input window, operand 1, single buffered']
    #allocation7 [shape = 's32[1]{0}', space=sflag, size = 0x4, scoped, tag = 'scoped memory for tpu_custom_call.1']
    #allocation8 [shape = 'u8[131072]{0}', space=vmem, size = 0x20000, scoped, tag = 'input window, operand 3, single buffered']
    %14 = vsyncpa [#allocation5], 0
    %15 = vsyncpa [#allocation7], 0
    // Predicated region
    $region2: #{tpu_custom_call.1} parent=1 // pred_check
      _
    $region3: #{tpu_custom_call.1} parent=1 // pred_check_branch
      %17 = sbr.rel (0) target = $region5
    $region4: #{tpu_custom_call.1} parent=1 // pred_region
      %s19 = ssub.s32 1024, 1024
      %20 = vsyncadd [#allocation5], %s19
      %s21 = sshll.u32 [#allocation4], 4
      %s22 = int_to_ptr.vmem [resolvable:$true] %s21
      %27 = dma.hbm_to_vmem [thread:$0]  %s0, 1024, %s22, [#allocation5], 512, 512, 32
    $region5: #{tpu_custom_call.1} parent=1 // pred_fallthru
      _
    // Predicated region
    $region6: #{tpu_custom_call.1} parent=1 // pred_check
      _
    $region7: #{tpu_custom_call.1} parent=1 // pred_check_branch
      %29 = sbr.rel (0) target = $region9
    $region8: #{tpu_custom_call.1} parent=1 // pred_region
      %s31 = ssub.s32 32768, 32768
      %32 = vsyncadd [#allocation7], %s31
      %s33 = sshll.u32 [#allocation6], 4
      %s34 = int_to_ptr.vmem [resolvable:$true] %s33
      %39 = dma.hbm_to_vmem [thread:$0]  %s1, 32768, %s34, [#allocation7], 256, 256, 16
    $region9: #{tpu_custom_call.1} parent=1 // pred_fallthru
      _
    // Predicated region
    $region10: #{tpu_custom_call.1} parent=1 // pred_check
      _
    $region11: #{tpu_custom_call.1} parent=1 // pred_check_branch
      %41 = sbr.rel (0) target = $region13
    $region12: #{tpu_custom_call.1} parent=1 // pred_region
      _
    $region13: #{tpu_custom_call.1} parent=1 // pred_fallthru
      _
    // Predicated region
    $region14: #{tpu_custom_call.1} parent=1 // pred_check
      _
    $region15: #{tpu_custom_call.1} parent=1 // pred_check_branch
      %43 = sbr.rel (0) target = $region17
    $region16: #{tpu_custom_call.1} parent=1 // pred_region
      %s45 = ssub.s32 4096, 4096
      %46 = vsyncadd [#allocation7], %s45
      %s47 = sshll.u32 [#allocation8], 4
      %s48 = int_to_ptr.vmem [resolvable:$true] %s47
      %53 = dma.hbm_to_vmem [thread:$0]  %s3, 4096, %s48, [#allocation7], 64, 64, 4
    $region17: #{tpu_custom_call.1} parent=1 // pred_fallthru
      _
    // Predicated region
    $region18: #{tpu_custom_call.1} parent=1 // pred_check
      _
    $region19: #{tpu_custom_call.1} parent=1 // pred_check_branch
      %55 = sbr.rel (0) target = $region21
    $region20: #{tpu_custom_call.1} parent=1 // pred_region
      _
    $region21: #{tpu_custom_call.1} parent=1 // pred_fallthru
      _
    // Predicated region
    $region22: #{tpu_custom_call.1} parent=1 // pred_check
      _
    $region23: #{tpu_custom_call.1} parent=1 // pred_check_branch
      %57 = sbr.rel (0) target = $region25
    $region24: #{tpu_custom_call.1} parent=1 // pred_region
      _
    $region25: #{tpu_custom_call.1} parent=1 // pred_fallthru
      _
    // Predicated region
    $region26: #{tpu_custom_call.1} parent=1 // pred_check
      _
    $region27: #{tpu_custom_call.1} parent=1 // pred_check_branch
      %59 = sbr.rel (0) target = $region29
    $region28: #{tpu_custom_call.1} parent=1 // pred_region
      _
    $region29: #{tpu_custom_call.1} parent=1 // pred_fallthru
      _
    // Predicated region
    $region30: #{tpu_custom_call.1} parent=1 // pred_check
      _
    $region31: #{tpu_custom_call.1} parent=1 // pred_check_branch
      %61 = sbr.rel (0) target = $region33
    $region32: #{tpu_custom_call.1} parent=1 // pred_region
      %62 = dma.done [#allocation5], 1024
    $region33: #{tpu_custom_call.1} parent=1 // pred_fallthru
      _
    // Predicated region
    $region34: #{tpu_custom_call.1} parent=1 // pred_check
      _
    $region35: #{tpu_custom_call.1} parent=1 // pred_check_branch
      %64 = sbr.rel (0) target = $region37
    $region36: #{tpu_custom_call.1} parent=1 // pred_region
      %65 = dma.done [#allocation7], 32768
    $region37: #{tpu_custom_call.1} parent=1 // pred_fallthru
      _
    // Predicated region
    $region38: #{tpu_custom_call.1} parent=1 // pred_check
      _
    $region39: #{tpu_custom_call.1} parent=1 // pred_check_branch
      %67 = sbr.rel (0) target = $region41
    $region40: #{tpu_custom_call.1} parent=1 // pred_region
      %68 = dma.done [#allocation7], 4096
    $region41: #{tpu_custom_call.1} parent=1 // pred_fallthru
      _
    %p70 = scmp.eq.s32.totalorder 0, 0
    // Predicated region
    $region42: #{tpu_custom_call.1} parent=1 // pred_check
      %p71 = pneg %p70
    $region43: #{tpu_custom_call.1} parent=1 // pred_check_branch
      %73 = sbr.rel (%p71) target = $region45
    $region44: #{tpu_custom_call.1} parent=1 // pred_region
      %s74 = smul.u32 0, 8
      %s75 = smul.addr %s74, 8
      %s76 = scalar_lea.vmem [#allocation2], %s75
      %77 = vst [vmem:[%s76] sm:$0xff] 0.0
      %78 = vst [vmem:[%s76 + $0x8] sm:$0xff] 0.0
      %79 = vst [vmem:[%s76 + $0x10] sm:$0xff] 0.0
      %80 = vst [vmem:[%s76 + $0x18] sm:$0xff] 0.0
      %81 = vst [vmem:[%s76 + $0x20] sm:$0xff] 0.0
      %82 = vst [vmem:[%s76 + $0x28] sm:$0xff] 0.0
      %83 = vst [vmem:[%s76 + $0x30] sm:$0xff] 0.0
      %84 = vst [vmem:[%s76 + $0x38] sm:$0xff] 0.0
    $region45: #{tpu_custom_call.1} parent=1 // pred_fallthru
      _
    %s85 = smul.u32 0, 8
    %s86 = smul.addr %s85, 8
    %s87 = scalar_lea.vmem [#allocation2], %s86
    %v88 = vld [vmem:[%s87] sm:$0xff]
    %v89 = vld [vmem:[%s87 + $0x8] sm:$0xff]
    %v90 = vld [vmem:[%s87 + $0x10] sm:$0xff]
    %v91 = vld [vmem:[%s87 + $0x18] sm:$0xff]
    %v92 = vld [vmem:[%s87 + $0x20] sm:$0xff]
    %v93 = vld [vmem:[%s87 + $0x28] sm:$0xff]
    %v94 = vld [vmem:[%s87 + $0x30] sm:$0xff]
    %v95 = vld [vmem:[%s87 + $0x38] sm:$0xff]
    %v96 = vld [vmem:[#allocation4] sm:$0xff]
    %v97 = vld [vmem:[#allocation4 + $0x8] sm:$0xff]
    %v98 = vld [vmem:[#allocation4 + $0x10] sm:$0xff]
    %v99 = vld [vmem:[#allocation4 + $0x18] sm:$0xff]
    %v100 = vld [vmem:[#allocation4 + $0x20] sm:$0xff]
    %v101 = vld [vmem:[#allocation4 + $0x28] sm:$0xff]
    %v102 = vld [vmem:[#allocation4 + $0x30] sm:$0xff]
    %v103 = vld [vmem:[#allocation4 + $0x38] sm:$0xff]
    %v104 = vld [vmem:[#allocation6] sm:$0xff]
    %v105 = vld [vmem:[#allocation6 + $0x8] sm:$0xff]
    %v106 = vld [vmem:[#allocation6 + $0x10] sm:$0xff]
    %v107 = vld [vmem:[#allocation6 + $0x18] sm:$0xff]
    %v108 = vld [vmem:[#allocation6 + $0x20] sm:$0xff]
    %v109 = vld [vmem:[#allocation6 + $0x28] sm:$0xff]
    %v110 = vld [vmem:[#allocation6 + $0x30] sm:$0xff]
    %v111 = vld [vmem:[#allocation6 + $0x38] sm:$0xff]
    %v112 = vld [vmem:[#allocation6 + $0x40] sm:$0xff]
    %v113 = vld [vmem:[#allocation6 + $0x48] sm:$0xff]
    %v114 = vld [vmem:[#allocation6 + $0x50] sm:$0xff]
    %v115 = vld [vmem:[#allocation6 + $0x58] sm:$0xff]
    %v116 = vld [vmem:[#allocation6 + $0x60] sm:$0xff]
    %v117 = vld [vmem:[#allocation6 + $0x68] sm:$0xff]
    %v118 = vld [vmem:[#allocation6 + $0x70] sm:$0xff]
    %v119 = vld [vmem:[#allocation6 + $0x78] sm:$0xff]
    %v120 = vld [vmem:[#allocation6 + $0x80] sm:$0xff]
    %v121 = vld [vmem:[#allocation6 + $0x88] sm:$0xff]
    %v122 = vld [vmem:[#allocation6 + $0x90] sm:$0xff]
    %v123 = vld [vmem:[#allocation6 + $0x98] sm:$0xff]
    %v124 = vld [vmem:[#allocation6 + $0xa0] sm:$0xff]
    %v125 = vld [vmem:[#allocation6 + $0xa8] sm:$0xff]
    %v126 = vld [vmem:[#allocation6 + $0xb0] sm:$0xff]
    %v127 = vld [vmem:[#allocation6 + $0xb8] sm:$0xff]
    %v128 = vld [vmem:[#allocation6 + $0xc0] sm:$0xff]
    %v129 = vld [vmem:[#allocation6 + $0xc8] sm:$0xff]
    %v130 = vld [vmem:[#allocation6 + $0xd0] sm:$0xff]
    %v131 = vld [vmem:[#allocation6 + $0xd8] sm:$0xff]
    %v132 = vld [vmem:[#allocation6 + $0xe0] sm:$0xff]
    %v133 = vld [vmem:[#allocation6 + $0xe8] sm:$0xff]
    %v134 = vld [vmem:[#allocation6 + $0xf0] sm:$0xff]
    %v135 = vld [vmem:[#allocation6 + $0xf8] sm:$0xff]
    %v136 = vld [vmem:[#allocation6 + $0x100] sm:$0xff]
    %v137 = vld [vmem:[#allocation6 + $0x108] sm:$0xff]
    %v138 = vld [vmem:[#allocation6 + $0x110] sm:$0xff]
    %v139 = vld [vmem:[#allocation6 + $0x118] sm:$0xff]
    %v140 = vld [vmem:[#allocation6 + $0x120] sm:$0xff]
    %v141 = vld [vmem:[#allocation6 + $0x128] sm:$0xff]
    %v142 = vld [vmem:[#allocation6 + $0x130] sm:$0xff]
    %v143 = vld [vmem:[#allocation6 + $0x138] sm:$0xff]
    %v144 = vld [vmem:[#allocation6 + $0x140] sm:$0xff]
    %v145 = vld [vmem:[#allocation6 + $0x148] sm:$0xff]
    %v146 = vld [vmem:[#allocation6 + $0x150] sm:$0xff]
    %v147 = vld [vmem:[#allocation6 + $0x158] sm:$0xff]
    %v148 = vld [vmem:[#allocation6 + $0x160] sm:$0xff]
    %v149 = vld [vmem:[#allocation6 + $0x168] sm:$0xff]
    %v150 = vld [vmem:[#allocation6 + $0x170] sm:$0xff]
    %v151 = vld [vmem:[#allocation6 + $0x178] sm:$0xff]
    %v152 = vld [vmem:[#allocation6 + $0x180] sm:$0xff]
    %v153 = vld [vmem:[#allocation6 + $0x188] sm:$0xff]
    %v154 = vld [vmem:[#allocation6 + $0x190] sm:$0xff]
    %v155 = vld [vmem:[#allocation6 + $0x198] sm:$0xff]
    %v156 = vld [vmem:[#allocation6 + $0x1a0] sm:$0xff]
    %v157 = vld [vmem:[#allocation6 + $0x1a8] sm:$0xff]
    %v158 = vld [vmem:[#allocation6 + $0x1b0] sm:$0xff]
    %v159 = vld [vmem:[#allocation6 + $0x1b8] sm:$0xff]
    %v160 = vld [vmem:[#allocation6 + $0x1c0] sm:$0xff]
    %v161 = vld [vmem:[#allocation6 + $0x1c8] sm:$0xff]
    %v162 = vld [vmem:[#allocation6 + $0x1d0] sm:$0xff]
    %v163 = vld [vmem:[#allocation6 + $0x1d8] sm:$0xff]
    %v164 = vld [vmem:[#allocation6 + $0x1e0] sm:$0xff]
    %v165 = vld [vmem:[#allocation6 + $0x1e8] sm:$0xff]
    %v166 = vld [vmem:[#allocation6 + $0x1f0] sm:$0xff]
    %v167 = vld [vmem:[#allocation6 + $0x1f8] sm:$0xff]
    %v168 = vld [vmem:[#allocation6 + $0x200] sm:$0xff]
    %v169 = vld [vmem:[#allocation6 + $0x208] sm:$0xff]
    %v170 = vld [vmem:[#allocation6 + $0x210] sm:$0xff]
    %v171 = vld [vmem:[#allocation6 + $0x218] sm:$0xff]
    %v172 = vld [vmem:[#allocation6 + $0x220] sm:$0xff]
    %v173 = vld [vmem:[#allocation6 + $0x228] sm:$0xff]
    %v174 = vld [vmem:[#allocation6 + $0x230] sm:$0xff]
    %v175 = vld [vmem:[#allocation6 + $0x238] sm:$0xff]
    %v176 = vld [vmem:[#allocation6 + $0x240] sm:$0xff]
    %v177 = vld [vmem:[#allocation6 + $0x248] sm:$0xff]
    %v178 = vld [vmem:[#allocation6 + $0x250] sm:$0xff]
    %v179 = vld [vmem:[#allocation6 + $0x258] sm:$0xff]
    %v180 = vld [vmem:[#allocation6 + $0x260] sm:$0xff]
    %v181 = vld [vmem:[#allocation6 + $0x268] sm:$0xff]
    %v182 = vld [vmem:[#allocation6 + $0x270] sm:$0xff]
    %v183 = vld [vmem:[#allocation6 + $0x278] sm:$0xff]
    %v184 = vld [vmem:[#allocation6 + $0x280] sm:$0xff]
    %v185 = vld [vmem:[#allocation6 + $0x288] sm:$0xff]
    %v186 = vld [vmem:[#allocation6 + $0x290] sm:$0xff]
    %v187 = vld [vmem:[#allocation6 + $0x298] sm:$0xff]
    %v188 = vld [vmem:[#allocation6 + $0x2a0] sm:$0xff]
    %v189 = vld [vmem:[#allocation6 + $0x2a8] sm:$0xff]
    %v190 = vld [vmem:[#allocation6 + $0x2b0] sm:$0xff]
    %v191 = vld [vmem:[#allocation6 + $0x2b8] sm:$0xff]
    %v192 = vld [vmem:[#allocation6 + $0x2c0] sm:$0xff]
    %v193 = vld [vmem:[#allocation6 + $0x2c8] sm:$0xff]
    %v194 = vld [vmem:[#allocation6 + $0x2d0] sm:$0xff]
    %v195 = vld [vmem:[#allocation6 + $0x2d8] sm:$0xff]
    %v196 = vld [vmem:[#allocation6 + $0x2e0] sm:$0xff]
    %v197 = vld [vmem:[#allocation6 + $0x2e8] sm:$0xff]
    %v198 = vld [vmem:[#allocation6 + $0x2f0] sm:$0xff]
    %v199 = vld [vmem:[#allocation6 + $0x2f8] sm:$0xff]
    %v200 = vld [vmem:[#allocation6 + $0x300] sm:$0xff]
    %v201 = vld [vmem:[#allocation6 + $0x308] sm:$0xff]
    %v202 = vld [vmem:[#allocation6 + $0x310] sm:$0xff]
    %v203 = vld [vmem:[#allocation6 + $0x318] sm:$0xff]
    %v204 = vld [vmem:[#allocation6 + $0x320] sm:$0xff]
    %v205 = vld [vmem:[#allocation6 + $0x328] sm:$0xff]
    %v206 = vld [vmem:[#allocation6 + $0x330] sm:$0xff]
    %v207 = vld [vmem:[#allocation6 + $0x338] sm:$0xff]
    %v208 = vld [vmem:[#allocation6 + $0x340] sm:$0xff]
    %v209 = vld [vmem:[#allocation6 + $0x348] sm:$0xff]
    %v210 = vld [vmem:[#allocation6 + $0x350] sm:$0xff]
    %v211 = vld [vmem:[#allocation6 + $0x358] sm:$0xff]
    %v212 = vld [vmem:[#allocation6 + $0x360] sm:$0xff]
    %v213 = vld [vmem:[#allocation6 + $0x368] sm:$0xff]
    %v214 = vld [vmem:[#allocation6 + $0x370] sm:$0xff]
    %v215 = vld [vmem:[#allocation6 + $0x378] sm:$0xff]
    %v216 = vld [vmem:[#allocation6 + $0x380] sm:$0xff]
    %v217 = vld [vmem:[#allocation6 + $0x388] sm:$0xff]
    %v218 = vld [vmem:[#allocation6 + $0x390] sm:$0xff]
    %v219 = vld [vmem:[#allocation6 + $0x398] sm:$0xff]
    %v220 = vld [vmem:[#allocation6 + $0x3a0] sm:$0xff]
    %v221 = vld [vmem:[#allocation6 + $0x3a8] sm:$0xff]
    %v222 = vld [vmem:[#allocation6 + $0x3b0] sm:$0xff]
    %v223 = vld [vmem:[#allocation6 + $0x3b8] sm:$0xff]
    %v224 = vld [vmem:[#allocation6 + $0x3c0] sm:$0xff]
    %v225 = vld [vmem:[#allocation6 + $0x3c8] sm:$0xff]
    %v226 = vld [vmem:[#allocation6 + $0x3d0] sm:$0xff]
    %v227 = vld [vmem:[#allocation6 + $0x3d8] sm:$0xff]
    %v228 = vld [vmem:[#allocation6 + $0x3e0] sm:$0xff]
    %v229 = vld [vmem:[#allocation6 + $0x3e8] sm:$0xff]
    %v230 = vld [vmem:[#allocation6 + $0x3f0] sm:$0xff]
    %v231 = vld [vmem:[#allocation6 + $0x3f8] sm:$0xff]
    %v232 = vld [vmem:[#allocation6 + $0x400] sm:$0xff]
    %v233 = vld [vmem:[#allocation6 + $0x408] sm:$0xff]
    %v234 = vld [vmem:[#allocation6 + $0x410] sm:$0xff]
    %v235 = vld [vmem:[#allocation6 + $0x418] sm:$0xff]
    %v236 = vld [vmem:[#allocation6 + $0x420] sm:$0xff]
    %v237 = vld [vmem:[#allocation6 + $0x428] sm:$0xff]
    %v238 = vld [vmem:[#allocation6 + $0x430] sm:$0xff]
    %v239 = vld [vmem:[#allocation6 + $0x438] sm:$0xff]
    %v240 = vld [vmem:[#allocation6 + $0x440] sm:$0xff]
    %v241 = vld [vmem:[#allocation6 + $0x448] sm:$0xff]
    %v242 = vld [vmem:[#allocation6 + $0x450] sm:$0xff]
    %v243 = vld [vmem:[#allocation6 + $0x458] sm:$0xff]
    %v244 = vld [vmem:[#allocation6 + $0x460] sm:$0xff]
    %v245 = vld [vmem:[#allocation6 + $0x468] sm:$0xff]
    %v246 = vld [vmem:[#allocation6 + $0x470] sm:$0xff]
    %v247 = vld [vmem:[#allocation6 + $0x478] sm:$0xff]
    %v248 = vld [vmem:[#allocation6 + $0x480] sm:$0xff]
    %v249 = vld [vmem:[#allocation6 + $0x488] sm:$0xff]
    %v250 = vld [vmem:[#allocation6 + $0x490] sm:$0xff]
    %v251 = vld [vmem:[#allocation6 + $0x498] sm:$0xff]
    %v252 = vld [vmem:[#allocation6 + $0x4a0] sm:$0xff]
    %v253 = vld [vmem:[#allocation6 + $0x4a8] sm:$0xff]
    %v254 = vld [vmem:[#allocation6 + $0x4b0] sm:$0xff]
    %v255 = vld [vmem:[#allocation6 + $0x4b8] sm:$0xff]
    %v256 = vld [vmem:[#allocation6 + $0x4c0] sm:$0xff]
    %v257 = vld [vmem:[#allocation6 + $0x4c8] sm:$0xff]
    %v258 = vld [vmem:[#allocation6 + $0x4d0] sm:$0xff]
    %v259 = vld [vmem:[#allocation6 + $0x4d8] sm:$0xff]
    %v260 = vld [vmem:[#allocation6 + $0x4e0] sm:$0xff]
    %v261 = vld [vmem:[#allocation6 + $0x4e8] sm:$0xff]
    %v262 = vld [vmem:[#allocation6 + $0x4f0] sm:$0xff]
    %v263 = vld [vmem:[#allocation6 + $0x4f8] sm:$0xff]
    %v264 = vld [vmem:[#allocation6 + $0x500] sm:$0xff]
    %v265 = vld [vmem:[#allocation6 + $0x508] sm:$0xff]
    %v266 = vld [vmem:[#allocation6 + $0x510] sm:$0xff]
    %v267 = vld [vmem:[#allocation6 + $0x518] sm:$0xff]
    %v268 = vld [vmem:[#allocation6 + $0x520] sm:$0xff]
    %v269 = vld [vmem:[#allocation6 + $0x528] sm:$0xff]
    %v270 = vld [vmem:[#allocation6 + $0x530] sm:$0xff]
    %v271 = vld [vmem:[#allocation6 + $0x538] sm:$0xff]
    %v272 = vld [vmem:[#allocation6 + $0x540] sm:$0xff]
    %v273 = vld [vmem:[#allocation6 + $0x548] sm:$0xff]
    %v274 = vld [vmem:[#allocation6 + $0x550] sm:$0xff]
    %v275 = vld [vmem:[#allocation6 + $0x558] sm:$0xff]
    %v276 = vld [vmem:[#allocation6 + $0x560] sm:$0xff]
    %v277 = vld [vmem:[#allocation6 + $0x568] sm:$0xff]
    %v278 = vld [vmem:[#allocation6 + $0x570] sm:$0xff]
    %v279 = vld [vmem:[#allocation6 + $0x578] sm:$0xff]
    %v280 = vld [vmem:[#allocation6 + $0x580] sm:$0xff]
    %v281 = vld [vmem:[#allocation6 + $0x588] sm:$0xff]
    %v282 = vld [vmem:[#allocation6 + $0x590] sm:$0xff]
    %v283 = vld [vmem:[#allocation6 + $0x598] sm:$0xff]
    %v284 = vld [vmem:[#allocation6 + $0x5a0] sm:$0xff]
    %v285 = vld [vmem:[#allocation6 + $0x5a8] sm:$0xff]
    %v286 = vld [vmem:[#allocation6 + $0x5b0] sm:$0xff]
    %v287 = vld [vmem:[#allocation6 + $0x5b8] sm:$0xff]
    %v288 = vld [vmem:[#allocation6 + $0x5c0] sm:$0xff]
    %v289 = vld [vmem:[#allocation6 + $0x5c8] sm:$0xff]
    %v290 = vld [vmem:[#allocation6 + $0x5d0] sm:$0xff]
    %v291 = vld [vmem:[#allocation6 + $0x5d8] sm:$0xff]
    %v292 = vld [vmem:[#allocation6 + $0x5e0] sm:$0xff]
    %v293 = vld [vmem:[#allocation6 + $0x5e8] sm:$0xff]
    %v294 = vld [vmem:[#allocation6 + $0x5f0] sm:$0xff]
    %v295 = vld [vmem:[#allocation6 + $0x5f8] sm:$0xff]
    %v296 = vld [vmem:[#allocation6 + $0x600] sm:$0xff]
    %v297 = vld [vmem:[#allocation6 + $0x608] sm:$0xff]
    %v298 = vld [vmem:[#allocation6 + $0x610] sm:$0xff]
    %v299 = vld [vmem:[#allocation6 + $0x618] sm:$0xff]
    %v300 = vld [vmem:[#allocation6 + $0x620] sm:$0xff]
    %v301 = vld [vmem:[#allocation6 + $0x628] sm:$0xff]
    %v302 = vld [vmem:[#allocation6 + $0x630] sm:$0xff]
    %v303 = vld [vmem:[#allocation6 + $0x638] sm:$0xff]
    %v304 = vld [vmem:[#allocation6 + $0x640] sm:$0xff]
    %v305 = vld [vmem:[#allocation6 + $0x648] sm:$0xff]
    %v306 = vld [vmem:[#allocation6 + $0x650] sm:$0xff]
    %v307 = vld [vmem:[#allocation6 + $0x658] sm:$0xff]
    %v308 = vld [vmem:[#allocation6 + $0x660] sm:$0xff]
    %v309 = vld [vmem:[#allocation6 + $0x668] sm:$0xff]
    %v310 = vld [vmem:[#allocation6 + $0x670] sm:$0xff]
    %v311 = vld [vmem:[#allocation6 + $0x678] sm:$0xff]
    %v312 = vld [vmem:[#allocation6 + $0x680] sm:$0xff]
    %v313 = vld [vmem:[#allocation6 + $0x688] sm:$0xff]
    %v314 = vld [vmem:[#allocation6 + $0x690] sm:$0xff]
    %v315 = vld [vmem:[#allocation6 + $0x698] sm:$0xff]
    %v316 = vld [vmem:[#allocation6 + $0x6a0] sm:$0xff]
    %v317 = vld [vmem:[#allocation6 + $0x6a8] sm:$0xff]
    %v318 = vld [vmem:[#allocation6 + $0x6b0] sm:$0xff]
    %v319 = vld [vmem:[#allocation6 + $0x6b8] sm:$0xff]
    %v320 = vld [vmem:[#allocation6 + $0x6c0] sm:$0xff]
    %v321 = vld [vmem:[#allocation6 + $0x6c8] sm:$0xff]
    %v322 = vld [vmem:[#allocation6 + $0x6d0] sm:$0xff]
    %v323 = vld [vmem:[#allocation6 + $0x6d8] sm:$0xff]
    %v324 = vld [vmem:[#allocation6 + $0x6e0] sm:$0xff]
    %v325 = vld [vmem:[#allocation6 + $0x6e8] sm:$0xff]
    %v326 = vld [vmem:[#allocation6 + $0x6f0] sm:$0xff]
    %v327 = vld [vmem:[#allocation6 + $0x6f8] sm:$0xff]
    %v328 = vld [vmem:[#allocation6 + $0x700] sm:$0xff]
    %v329 = vld [vmem:[#allocation6 + $0x708] sm:$0xff]
    %v330 = vld [vmem:[#allocation6 + $0x710] sm:$0xff]
    %v331 = vld [vmem:[#allocation6 + $0x718] sm:$0xff]
    %v332 = vld [vmem:[#allocation6 + $0x720] sm:$0xff]
    %v333 = vld [vmem:[#allocation6 + $0x728] sm:$0xff]
    %v334 = vld [vmem:[#allocation6 + $0x730] sm:$0xff]
    %v335 = vld [vmem:[#allocation6 + $0x738] sm:$0xff]
    %v336 = vld [vmem:[#allocation6 + $0x740] sm:$0xff]
    %v337 = vld [vmem:[#allocation6 + $0x748] sm:$0xff]
    %v338 = vld [vmem:[#allocation6 + $0x750] sm:$0xff]
    %v339 = vld [vmem:[#allocation6 + $0x758] sm:$0xff]
    %v340 = vld [vmem:[#allocation6 + $0x760] sm:$0xff]
    %v341 = vld [vmem:[#allocation6 + $0x768] sm:$0xff]
    %v342 = vld [vmem:[#allocation6 + $0x770] sm:$0xff]
    %v343 = vld [vmem:[#allocation6 + $0x778] sm:$0xff]
    %v344 = vld [vmem:[#allocation6 + $0x780] sm:$0xff]
    %v345 = vld [vmem:[#allocation6 + $0x788] sm:$0xff]
    %v346 = vld [vmem:[#allocation6 + $0x790] sm:$0xff]
    %v347 = vld [vmem:[#allocation6 + $0x798] sm:$0xff]
    %v348 = vld [vmem:[#allocation6 + $0x7a0] sm:$0xff]
    %v349 = vld [vmem:[#allocation6 + $0x7a8] sm:$0xff]
    %v350 = vld [vmem:[#allocation6 + $0x7b0] sm:$0xff]
    %v351 = vld [vmem:[#allocation6 + $0x7b8] sm:$0xff]
    %v352 = vld [vmem:[#allocation6 + $0x7c0] sm:$0xff]
    %v353 = vld [vmem:[#allocation6 + $0x7c8] sm:$0xff]
    %v354 = vld [vmem:[#allocation6 + $0x7d0] sm:$0xff]
    %v355 = vld [vmem:[#allocation6 + $0x7d8] sm:$0xff]
    %v356 = vld [vmem:[#allocation6 + $0x7e0] sm:$0xff]
    %v357 = vld [vmem:[#allocation6 + $0x7e8] sm:$0xff]
    %v358 = vld [vmem:[#allocation6 + $0x7f0] sm:$0xff]
    %v359 = vld [vmem:[#allocation6 + $0x7f8] sm:$0xff]
    %v368 = vunpack.c.l.b16 %v96
    %v369 = vunpack.c.h.b16 %v96
    %v370 = vunpack.c.l.b16 %v97
    %v371 = vunpack.c.h.b16 %v97
    %v372 = vunpack.c.l.b16 %v98
    %v373 = vunpack.c.h.b16 %v98
    %v374 = vunpack.c.l.b16 %v99
    %v375 = vunpack.c.h.b16 %v99
    %v376 = vunpack.c.l.b16 %v100
    %v377 = vunpack.c.h.b16 %v100
    %v378 = vunpack.c.l.b16 %v101
    %v379 = vunpack.c.h.b16 %v101
    %v380 = vunpack.c.l.b16 %v102
    %v381 = vunpack.c.h.b16 %v102
    %v382 = vunpack.c.l.b16 %v103
    %v383 = vunpack.c.h.b16 %v103
    %v384 = vpack.c.b16 %v376, %v368
    %v385 = vpack.c.b16 %v377, %v369
    %v386 = vpack.c.b16 %v378, %v370
    %v387 = vpack.c.b16 %v379, %v371
    %v388 = vpack.c.b16 %v380, %v372
    %v389 = vpack.c.b16 %v381, %v373
    %v390 = vpack.c.b16 %v382, %v374
    %v391 = vpack.c.b16 %v383, %v375
    %v656 = vunpack.c.l.b16 %v104
    %v657 = vunpack.c.h.b16 %v104
    %v658 = vunpack.c.l.b16 %v105
    %v659 = vunpack.c.h.b16 %v105
    %v660 = vunpack.c.l.b16 %v106
    %v661 = vunpack.c.h.b16 %v106
    %v662 = vunpack.c.l.b16 %v107
    %v663 = vunpack.c.h.b16 %v107
    %v664 = vunpack.c.l.b16 %v108
    %v665 = vunpack.c.h.b16 %v108
    %v666 = vunpack.c.l.b16 %v109
    %v667 = vunpack.c.h.b16 %v109
    %v668 = vunpack.c.l.b16 %v110
    %v669 = vunpack.c.h.b16 %v110
    %v670 = vunpack.c.l.b16 %v111
    %v671 = vunpack.c.h.b16 %v111
    %v672 = vunpack.c.l.b16 %v112
    %v673 = vunpack.c.h.b16 %v112
    %v674 = vunpack.c.l.b16 %v113
    %v675 = vunpack.c.h.b16 %v113
    %v676 = vunpack.c.l.b16 %v114
    %v677 = vunpack.c.h.b16 %v114
    %v678 = vunpack.c.l.b16 %v115
    %v679 = vunpack.c.h.b16 %v115
    %v680 = vunpack.c.l.b16 %v116
    %v681 = vunpack.c.h.b16 %v116
    %v682 = vunpack.c.l.b16 %v117
    %v683 = vunpack.c.h.b16 %v117
    %v684 = vunpack.c.l.b16 %v118
    %v685 = vunpack.c.h.b16 %v118
    %v686 = vunpack.c.l.b16 %v119
    %v687 = vunpack.c.h.b16 %v119
    %v688 = vunpack.c.l.b16 %v120
    %v689 = vunpack.c.h.b16 %v120
    %v690 = vunpack.c.l.b16 %v121
    %v691 = vunpack.c.h.b16 %v121
    %v692 = vunpack.c.l.b16 %v122
    %v693 = vunpack.c.h.b16 %v122
    %v694 = vunpack.c.l.b16 %v123
    %v695 = vunpack.c.h.b16 %v123
    %v696 = vunpack.c.l.b16 %v124
    %v697 = vunpack.c.h.b16 %v124
    %v698 = vunpack.c.l.b16 %v125
    %v699 = vunpack.c.h.b16 %v125
    %v700 = vunpack.c.l.b16 %v126
    %v701 = vunpack.c.h.b16 %v126
    %v702 = vunpack.c.l.b16 %v127
    %v703 = vunpack.c.h.b16 %v127
    %v704 = vunpack.c.l.b16 %v128
    %v705 = vunpack.c.h.b16 %v128
    %v706 = vunpack.c.l.b16 %v129
    %v707 = vunpack.c.h.b16 %v129
    %v708 = vunpack.c.l.b16 %v130
    %v709 = vunpack.c.h.b16 %v130
    %v710 = vunpack.c.l.b16 %v131
    %v711 = vunpack.c.h.b16 %v131
    %v712 = vunpack.c.l.b16 %v132
    %v713 = vunpack.c.h.b16 %v132
    %v714 = vunpack.c.l.b16 %v133
    %v715 = vunpack.c.h.b16 %v133
    %v716 = vunpack.c.l.b16 %v134
    %v717 = vunpack.c.h.b16 %v134
    %v718 = vunpack.c.l.b16 %v135
    %v719 = vunpack.c.h.b16 %v135
    %v720 = vunpack.c.l.b16 %v136
    %v721 = vunpack.c.h.b16 %v136
    %v722 = vunpack.c.l.b16 %v137
    %v723 = vunpack.c.h.b16 %v137
    %v724 = vunpack.c.l.b16 %v138
    %v725 = vunpack.c.h.b16 %v138
    %v726 = vunpack.c.l.b16 %v139
    %v727 = vunpack.c.h.b16 %v139
    %v728 = vunpack.c.l.b16 %v140
    %v729 = vunpack.c.h.b16 %v140
    %v730 = vunpack.c.l.b16 %v141
    %v731 = vunpack.c.h.b16 %v141
    %v732 = vunpack.c.l.b16 %v142
    %v733 = vunpack.c.h.b16 %v142
    %v734 = vunpack.c.l.b16 %v143
    %v735 = vunpack.c.h.b16 %v143
    %v736 = vunpack.c.l.b16 %v144
    %v737 = vunpack.c.h.b16 %v144
    %v738 = vunpack.c.l.b16 %v145
    %v739 = vunpack.c.h.b16 %v145
    %v740 = vunpack.c.l.b16 %v146
    %v741 = vunpack.c.h.b16 %v146
    %v742 = vunpack.c.l.b16 %v147
    %v743 = vunpack.c.h.b16 %v147
    %v744 = vunpack.c.l.b16 %v148
    %v745 = vunpack.c.h.b16 %v148
    %v746 = vunpack.c.l.b16 %v149
    %v747 = vunpack.c.h.b16 %v149
    %v748 = vunpack.c.l.b16 %v150
    %v749 = vunpack.c.h.b16 %v150
    %v750 = vunpack.c.l.b16 %v151
    %v751 = vunpack.c.h.b16 %v151
    %v752 = vunpack.c.l.b16 %v152
    %v753 = vunpack.c.h.b16 %v152
    %v754 = vunpack.c.l.b16 %v153
    %v755 = vunpack.c.h.b16 %v153
    %v756 = vunpack.c.l.b16 %v154
    %v757 = vunpack.c.h.b16 %v154
    %v758 = vunpack.c.l.b16 %v155
    %v759 = vunpack.c.h.b16 %v155
    %v760 = vunpack.c.l.b16 %v156
    %v761 = vunpack.c.h.b16 %v156
    %v762 = vunpack.c.l.b16 %v157
    %v763 = vunpack.c.h.b16 %v157
    %v764 = vunpack.c.l.b16 %v158
    %v765 = vunpack.c.h.b16 %v158
    %v766 = vunpack.c.l.b16 %v159
    %v767 = vunpack.c.h.b16 %v159
    %v768 = vunpack.c.l.b16 %v160
    %v769 = vunpack.c.h.b16 %v160
    %v770 = vunpack.c.l.b16 %v161
    %v771 = vunpack.c.h.b16 %v161
    %v772 = vunpack.c.l.b16 %v162
    %v773 = vunpack.c.h.b16 %v162
    %v774 = vunpack.c.l.b16 %v163
    %v775 = vunpack.c.h.b16 %v163
    %v776 = vunpack.c.l.b16 %v164
    %v777 = vunpack.c.h.b16 %v164
    %v778 = vunpack.c.l.b16 %v165
    %v779 = vunpack.c.h.b16 %v165
    %v780 = vunpack.c.l.b16 %v166
    %v781 = vunpack.c.h.b16 %v166
    %v782 = vunpack.c.l.b16 %v167
    %v783 = vunpack.c.h.b16 %v167
    %v784 = vunpack.c.l.b16 %v168
    %v785 = vunpack.c.h.b16 %v168
    %v786 = vunpack.c.l.b16 %v169
    %v787 = vunpack.c.h.b16 %v169
    %v788 = vunpack.c.l.b16 %v170
    %v789 = vunpack.c.h.b16 %v170
    %v790 = vunpack.c.l.b16 %v171
    %v791 = vunpack.c.h.b16 %v171
    %v792 = vunpack.c.l.b16 %v172
    %v793 = vunpack.c.h.b16 %v172
    %v794 = vunpack.c.l.b16 %v173
    %v795 = vunpack.c.h.b16 %v173
    %v796 = vunpack.c.l.b16 %v174
    %v797 = vunpack.c.h.b16 %v174
    %v798 = vunpack.c.l.b16 %v175
    %v799 = vunpack.c.h.b16 %v175
    %v800 = vunpack.c.l.b16 %v176
    %v801 = vunpack.c.h.b16 %v176
    %v802 = vunpack.c.l.b16 %v177
    %v803 = vunpack.c.h.b16 %v177
    %v804 = vunpack.c.l.b16 %v178
    %v805 = vunpack.c.h.b16 %v178
    %v806 = vunpack.c.l.b16 %v179
    %v807 = vunpack.c.h.b16 %v179
    %v808 = vunpack.c.l.b16 %v180
    %v809 = vunpack.c.h.b16 %v180
    %v810 = vunpack.c.l.b16 %v181
    %v811 = vunpack.c.h.b16 %v181
    %v812 = vunpack.c.l.b16 %v182
    %v813 = vunpack.c.h.b16 %v182
    %v814 = vunpack.c.l.b16 %v183
    %v815 = vunpack.c.h.b16 %v183
    %v816 = vunpack.c.l.b16 %v184
    %v817 = vunpack.c.h.b16 %v184
    %v818 = vunpack.c.l.b16 %v185
    %v819 = vunpack.c.h.b16 %v185
    %v820 = vunpack.c.l.b16 %v186
    %v821 = vunpack.c.h.b16 %v186
    %v822 = vunpack.c.l.b16 %v187
    %v823 = vunpack.c.h.b16 %v187
    %v824 = vunpack.c.l.b16 %v188
    %v825 = vunpack.c.h.b16 %v188
    %v826 = vunpack.c.l.b16 %v189
    %v827 = vunpack.c.h.b16 %v189
    %v828 = vunpack.c.l.b16 %v190
    %v829 = vunpack.c.h.b16 %v190
    %v830 = vunpack.c.l.b16 %v191
    %v831 = vunpack.c.h.b16 %v191
    %v832 = vunpack.c.l.b16 %v192
    %v833 = vunpack.c.h.b16 %v192
    %v834 = vunpack.c.l.b16 %v193
    %v835 = vunpack.c.h.b16 %v193
    %v836 = vunpack.c.l.b16 %v194
    %v837 = vunpack.c.h.b16 %v194
    %v838 = vunpack.c.l.b16 %v195
    %v839 = vunpack.c.h.b16 %v195
    %v840 = vunpack.c.l.b16 %v196
    %v841 = vunpack.c.h.b16 %v196
    %v842 = vunpack.c.l.b16 %v197
    %v843 = vunpack.c.h.b16 %v197
    %v844 = vunpack.c.l.b16 %v198
    %v845 = vunpack.c.h.b16 %v198
    %v846 = vunpack.c.l.b16 %v199
    %v847 = vunpack.c.h.b16 %v199
    %v848 = vunpack.c.l.b16 %v200
    %v849 = vunpack.c.h.b16 %v200
    %v850 = vunpack.c.l.b16 %v201
    %v851 = vunpack.c.h.b16 %v201
    %v852 = vunpack.c.l.b16 %v202
    %v853 = vunpack.c.h.b16 %v202
    %v854 = vunpack.c.l.b16 %v203
    %v855 = vunpack.c.h.b16 %v203
    %v856 = vunpack.c.l.b16 %v204
    %v857 = vunpack.c.h.b16 %v204
    %v858 = vunpack.c.l.b16 %v205
    %v859 = vunpack.c.h.b16 %v205
    %v860 = vunpack.c.l.b16 %v206
    %v861 = vunpack.c.h.b16 %v206
    %v862 = vunpack.c.l.b16 %v207
    %v863 = vunpack.c.h.b16 %v207
    %v864 = vunpack.c.l.b16 %v208
    %v865 = vunpack.c.h.b16 %v208
    %v866 = vunpack.c.l.b16 %v209
    %v867 = vunpack.c.h.b16 %v209
    %v868 = vunpack.c.l.b16 %v210
    %v869 = vunpack.c.h.b16 %v210
    %v870 = vunpack.c.l.b16 %v211
    %v871 = vunpack.c.h.b16 %v211
    %v872 = vunpack.c.l.b16 %v212
    %v873 = vunpack.c.h.b16 %v212
    %v874 = vunpack.c.l.b16 %v213
    %v875 = vunpack.c.h.b16 %v213
    %v876 = vunpack.c.l.b16 %v214
    %v877 = vunpack.c.h.b16 %v214
    %v878 = vunpack.c.l.b16 %v215
    %v879 = vunpack.c.h.b16 %v215
    %v880 = vunpack.c.l.b16 %v216
    %v881 = vunpack.c.h.b16 %v216
    %v882 = vunpack.c.l.b16 %v217
    %v883 = vunpack.c.h.b16 %v217
    %v884 = vunpack.c.l.b16 %v218
    %v885 = vunpack.c.h.b16 %v218
    %v886 = vunpack.c.l.b16 %v219
    %v887 = vunpack.c.h.b16 %v219
    %v888 = vunpack.c.l.b16 %v220
    %v889 = vunpack.c.h.b16 %v220
    %v890 = vunpack.c.l.b16 %v221
    %v891 = vunpack.c.h.b16 %v221
    %v892 = vunpack.c.l.b16 %v222
    %v893 = vunpack.c.h.b16 %v222
    %v894 = vunpack.c.l.b16 %v223
    %v895 = vunpack.c.h.b16 %v223
    %v896 = vunpack.c.l.b16 %v224
    %v897 = vunpack.c.h.b16 %v224
    %v898 = vunpack.c.l.b16 %v225
    %v899 = vunpack.c.h.b16 %v225
    %v900 = vunpack.c.l.b16 %v226
    %v901 = vunpack.c.h.b16 %v226
    %v902 = vunpack.c.l.b16 %v227
    %v903 = vunpack.c.h.b16 %v227
    %v904 = vunpack.c.l.b16 %v228
    %v905 = vunpack.c.h.b16 %v228
    %v906 = vunpack.c.l.b16 %v229
    %v907 = vunpack.c.h.b16 %v229
    %v908 = vunpack.c.l.b16 %v230
    %v909 = vunpack.c.h.b16 %v230
    %v910 = vunpack.c.l.b16 %v231
    %v911 = vunpack.c.h.b16 %v231
    %v912 = vunpack.c.l.b16 %v232
    %v913 = vunpack.c.h.b16 %v232
    %v914 = vunpack.c.l.b16 %v233
    %v915 = vunpack.c.h.b16 %v233
    %v916 = vunpack.c.l.b16 %v234
    %v917 = vunpack.c.h.b16 %v234
    %v918 = vunpack.c.l.b16 %v235
    %v919 = vunpack.c.h.b16 %v235
    %v920 = vunpack.c.l.b16 %v236
    %v921 = vunpack.c.h.b16 %v236
    %v922 = vunpack.c.l.b16 %v237
    %v923 = vunpack.c.h.b16 %v237
    %v924 = vunpack.c.l.b16 %v238
    %v925 = vunpack.c.h.b16 %v238
    %v926 = vunpack.c.l.b16 %v239
    %v927 = vunpack.c.h.b16 %v239
    %v928 = vunpack.c.l.b16 %v240
    %v929 = vunpack.c.h.b16 %v240
    %v930 = vunpack.c.l.b16 %v241
    %v931 = vunpack.c.h.b16 %v241
    %v932 = vunpack.c.l.b16 %v242
    %v933 = vunpack.c.h.b16 %v242
    %v934 = vunpack.c.l.b16 %v243
    %v935 = vunpack.c.h.b16 %v243
    %v936 = vunpack.c.l.b16 %v244
    %v937 = vunpack.c.h.b16 %v244
    %v938 = vunpack.c.l.b16 %v245
    %v939 = vunpack.c.h.b16 %v245
    %v940 = vunpack.c.l.b16 %v246
    %v941 = vunpack.c.h.b16 %v246
    %v942 = vunpack.c.l.b16 %v247
    %v943 = vunpack.c.h.b16 %v247
    %v944 = vunpack.c.l.b16 %v248
    %v945 = vunpack.c.h.b16 %v248
    %v946 = vunpack.c.l.b16 %v249
    %v947 = vunpack.c.h.b16 %v249
    %v948 = vunpack.c.l.b16 %v250
    %v949 = vunpack.c.h.b16 %v250
    %v950 = vunpack.c.l.b16 %v251
    %v951 = vunpack.c.h.b16 %v251
    %v952 = vunpack.c.l.b16 %v252
    %v953 = vunpack.c.h.b16 %v252
    %v954 = vunpack.c.l.b16 %v253
    %v955 = vunpack.c.h.b16 %v253
    %v956 = vunpack.c.l.b16 %v254
    %v957 = vunpack.c.h.b16 %v254
    %v958 = vunpack.c.l.b16 %v255
    %v959 = vunpack.c.h.b16 %v255
    %v960 = vunpack.c.l.b16 %v256
    %v961 = vunpack.c.h.b16 %v256
    %v962 = vunpack.c.l.b16 %v257
    %v963 = vunpack.c.h.b16 %v257
    %v964 = vunpack.c.l.b16 %v258
    %v965 = vunpack.c.h.b16 %v258
    %v966 = vunpack.c.l.b16 %v259
    %v967 = vunpack.c.h.b16 %v259
    %v968 = vunpack.c.l.b16 %v260
    %v969 = vunpack.c.h.b16 %v260
    %v970 = vunpack.c.l.b16 %v261
    %v971 = vunpack.c.h.b16 %v261
    %v972 = vunpack.c.l.b16 %v262
    %v973 = vunpack.c.h.b16 %v262
    %v974 = vunpack.c.l.b16 %v263
    %v975 = vunpack.c.h.b16 %v263
    %v976 = vunpack.c.l.b16 %v264
    %v977 = vunpack.c.h.b16 %v264
    %v978 = vunpack.c.l.b16 %v265
    %v979 = vunpack.c.h.b16 %v265
    %v980 = vunpack.c.l.b16 %v266
    %v981 = vunpack.c.h.b16 %v266
    %v982 = vunpack.c.l.b16 %v267
    %v983 = vunpack.c.h.b16 %v267
    %v984 = vunpack.c.l.b16 %v268
    %v985 = vunpack.c.h.b16 %v268
    %v986 = vunpack.c.l.b16 %v269
    %v987 = vunpack.c.h.b16 %v269
    %v988 = vunpack.c.l.b16 %v270
    %v989 = vunpack.c.h.b16 %v270
    %v990 = vunpack.c.l.b16 %v271
    %v991 = vunpack.c.h.b16 %v271
    %v992 = vunpack.c.l.b16 %v272
    %v993 = vunpack.c.h.b16 %v272
    %v994 = vunpack.c.l.b16 %v273
    %v995 = vunpack.c.h.b16 %v273
    %v996 = vunpack.c.l.b16 %v274
    %v997 = vunpack.c.h.b16 %v274
    %v998 = vunpack.c.l.b16 %v275
    %v999 = vunpack.c.h.b16 %v275
    %v1000 = vunpack.c.l.b16 %v276
    %v1001 = vunpack.c.h.b16 %v276
    %v1002 = vunpack.c.l.b16 %v277
    %v1003 = vunpack.c.h.b16 %v277
    %v1004 = vunpack.c.l.b16 %v278
    %v1005 = vunpack.c.h.b16 %v278
    %v1006 = vunpack.c.l.b16 %v279
    %v1007 = vunpack.c.h.b16 %v279
    %v1008 = vunpack.c.l.b16 %v280
    %v1009 = vunpack.c.h.b16 %v280
    %v1010 = vunpack.c.l.b16 %v281
    %v1011 = vunpack.c.h.b16 %v281
    %v1012 = vunpack.c.l.b16 %v282
    %v1013 = vunpack.c.h.b16 %v282
    %v1014 = vunpack.c.l.b16 %v283
    %v1015 = vunpack.c.h.b16 %v283
    %v1016 = vunpack.c.l.b16 %v284
    %v1017 = vunpack.c.h.b16 %v284
    %v1018 = vunpack.c.l.b16 %v285
    %v1019 = vunpack.c.h.b16 %v285
    %v1020 = vunpack.c.l.b16 %v286
    %v1021 = vunpack.c.h.b16 %v286
    %v1022 = vunpack.c.l.b16 %v287
    %v1023 = vunpack.c.h.b16 %v287
    %v1024 = vunpack.c.l.b16 %v288
    %v1025 = vunpack.c.h.b16 %v288
    %v1026 = vunpack.c.l.b16 %v289
    %v1027 = vunpack.c.h.b16 %v289
    %v1028 = vunpack.c.l.b16 %v290
    %v1029 = vunpack.c.h.b16 %v290
    %v1030 = vunpack.c.l.b16 %v291
    %v1031 = vunpack.c.h.b16 %v291
    %v1032 = vunpack.c.l.b16 %v292
    %v1033 = vunpack.c.h.b16 %v292
    %v1034 = vunpack.c.l.b16 %v293
    %v1035 = vunpack.c.h.b16 %v293
    %v1036 = vunpack.c.l.b16 %v294
    %v1037 = vunpack.c.h.b16 %v294
    %v1038 = vunpack.c.l.b16 %v295
    %v1039 = vunpack.c.h.b16 %v295
    %v1040 = vunpack.c.l.b16 %v296
    %v1041 = vunpack.c.h.b16 %v296
    %v1042 = vunpack.c.l.b16 %v297
    %v1043 = vunpack.c.h.b16 %v297
    %v1044 = vunpack.c.l.b16 %v298
    %v1045 = vunpack.c.h.b16 %v298
    %v1046 = vunpack.c.l.b16 %v299
    %v1047 = vunpack.c.h.b16 %v299
    %v1048 = vunpack.c.l.b16 %v300
    %v1049 = vunpack.c.h.b16 %v300
    %v1050 = vunpack.c.l.b16 %v301
    %v1051 = vunpack.c.h.b16 %v301
    %v1052 = vunpack.c.l.b16 %v302
    %v1053 = vunpack.c.h.b16 %v302
    %v1054 = vunpack.c.l.b16 %v303
    %v1055 = vunpack.c.h.b16 %v303
    %v1056 = vunpack.c.l.b16 %v304
    %v1057 = vunpack.c.h.b16 %v304
    %v1058 = vunpack.c.l.b16 %v305
    %v1059 = vunpack.c.h.b16 %v305
    %v1060 = vunpack.c.l.b16 %v306
    %v1061 = vunpack.c.h.b16 %v306
    %v1062 = vunpack.c.l.b16 %v307
    %v1063 = vunpack.c.h.b16 %v307
    %v1064 = vunpack.c.l.b16 %v308
    %v1065 = vunpack.c.h.b16 %v308
    %v1066 = vunpack.c.l.b16 %v309
    %v1067 = vunpack.c.h.b16 %v309
    %v1068 = vunpack.c.l.b16 %v310
    %v1069 = vunpack.c.h.b16 %v310
    %v1070 = vunpack.c.l.b16 %v311
    %v1071 = vunpack.c.h.b16 %v311
    %v1072 = vunpack.c.l.b16 %v312
    %v1073 = vunpack.c.h.b16 %v312
    %v1074 = vunpack.c.l.b16 %v313
    %v1075 = vunpack.c.h.b16 %v313
    %v1076 = vunpack.c.l.b16 %v314
    %v1077 = vunpack.c.h.b16 %v314
    %v1078 = vunpack.c.l.b16 %v315
    %v1079 = vunpack.c.h.b16 %v315
    %v1080 = vunpack.c.l.b16 %v316
    %v1081 = vunpack.c.h.b16 %v316
    %v1082 = vunpack.c.l.b16 %v317
    %v1083 = vunpack.c.h.b16 %v317
    %v1084 = vunpack.c.l.b16 %v318
    %v1085 = vunpack.c.h.b16 %v318
    %v1086 = vunpack.c.l.b16 %v319
    %v1087 = vunpack.c.h.b16 %v319
    %v1088 = vunpack.c.l.b16 %v320
    %v1089 = vunpack.c.h.b16 %v320
    %v1090 = vunpack.c.l.b16 %v321
    %v1091 = vunpack.c.h.b16 %v321
    %v1092 = vunpack.c.l.b16 %v322
    %v1093 = vunpack.c.h.b16 %v322
    %v1094 = vunpack.c.l.b16 %v323
    %v1095 = vunpack.c.h.b16 %v323
    %v1096 = vunpack.c.l.b16 %v324
    %v1097 = vunpack.c.h.b16 %v324
    %v1098 = vunpack.c.l.b16 %v325
    %v1099 = vunpack.c.h.b16 %v325
    %v1100 = vunpack.c.l.b16 %v326
    %v1101 = vunpack.c.h.b16 %v326
    %v1102 = vunpack.c.l.b16 %v327
    %v1103 = vunpack.c.h.b16 %v327
    %v1104 = vunpack.c.l.b16 %v328
    %v1105 = vunpack.c.h.b16 %v328
    %v1106 = vunpack.c.l.b16 %v329
    %v1107 = vunpack.c.h.b16 %v329
    %v1108 = vunpack.c.l.b16 %v330
    %v1109 = vunpack.c.h.b16 %v330
    %v1110 = vunpack.c.l.b16 %v331
    %v1111 = vunpack.c.h.b16 %v331
    %v1112 = vunpack.c.l.b16 %v332
    %v1113 = vunpack.c.h.b16 %v332
    %v1114 = vunpack.c.l.b16 %v333
    %v1115 = vunpack.c.h.b16 %v333
    %v1116 = vunpack.c.l.b16 %v334
    %v1117 = vunpack.c.h.b16 %v334
    %v1118 = vunpack.c.l.b16 %v335
    %v1119 = vunpack.c.h.b16 %v335
    %v1120 = vunpack.c.l.b16 %v336
    %v1121 = vunpack.c.h.b16 %v336
    %v1122 = vunpack.c.l.b16 %v337
    %v1123 = vunpack.c.h.b16 %v337
    %v1124 = vunpack.c.l.b16 %v338
    %v1125 = vunpack.c.h.b16 %v338
    %v1126 = vunpack.c.l.b16 %v339
    %v1127 = vunpack.c.h.b16 %v339
    %v1128 = vunpack.c.l.b16 %v340
    %v1129 = vunpack.c.h.b16 %v340
    %v1130 = vunpack.c.l.b16 %v341
    %v1131 = vunpack.c.h.b16 %v341
    %v1132 = vunpack.c.l.b16 %v342
    %v1133 = vunpack.c.h.b16 %v342
    %v1134 = vunpack.c.l.b16 %v343
    %v1135 = vunpack.c.h.b16 %v343
    %v1136 = vunpack.c.l.b16 %v344
    %v1137 = vunpack.c.h.b16 %v344
    %v1138 = vunpack.c.l.b16 %v345
    %v1139 = vunpack.c.h.b16 %v345
    %v1140 = vunpack.c.l.b16 %v346
    %v1141 = vunpack.c.h.b16 %v346
    %v1142 = vunpack.c.l.b16 %v347
    %v1143 = vunpack.c.h.b16 %v347
    %v1144 = vunpack.c.l.b16 %v348
    %v1145 = vunpack.c.h.b16 %v348
    %v1146 = vunpack.c.l.b16 %v349
    %v1147 = vunpack.c.h.b16 %v349
    %v1148 = vunpack.c.l.b16 %v350
    %v1149 = vunpack.c.h.b16 %v350
    %v1150 = vunpack.c.l.b16 %v351
    %v1151 = vunpack.c.h.b16 %v351
    %v1152 = vunpack.c.l.b16 %v352
    %v1153 = vunpack.c.h.b16 %v352
    %v1154 = vunpack.c.l.b16 %v353
    %v1155 = vunpack.c.h.b16 %v353
    %v1156 = vunpack.c.l.b16 %v354
    %v1157 = vunpack.c.h.b16 %v354
    %v1158 = vunpack.c.l.b16 %v355
    %v1159 = vunpack.c.h.b16 %v355
    %v1160 = vunpack.c.l.b16 %v356
    %v1161 = vunpack.c.h.b16 %v356
    %v1162 = vunpack.c.l.b16 %v357
    %v1163 = vunpack.c.h.b16 %v357
    %v1164 = vunpack.c.l.b16 %v358
    %v1165 = vunpack.c.h.b16 %v358
    %v1166 = vunpack.c.l.b16 %v359
    %v1167 = vunpack.c.h.b16 %v359
    %v1168 = vpack.c.b16 %v660, %v656
    %v1169 = vpack.c.b16 %v661, %v657
    %v1170 = vpack.c.b16 %v662, %v658
    %v1171 = vpack.c.b16 %v663, %v659
    %v1172 = vpack.c.b16 %v668, %v664
    %v1173 = vpack.c.b16 %v669, %v665
    %v1174 = vpack.c.b16 %v670, %v666
    %v1175 = vpack.c.b16 %v671, %v667
    %v1176 = vpack.c.b16 %v676, %v672
    %v1177 = vpack.c.b16 %v677, %v673
    %v1178 = vpack.c.b16 %v678, %v674
    %v1179 = vpack.c.b16 %v679, %v675
    %v1180 = vpack.c.b16 %v684, %v680
    %v1181 = vpack.c.b16 %v685, %v681
    %v1182 = vpack.c.b16 %v686, %v682
    %v1183 = vpack.c.b16 %v687, %v683
    %v1184 = vpack.c.b16 %v692, %v688
    %v1185 = vpack.c.b16 %v693, %v689
    %v1186 = vpack.c.b16 %v694, %v690
    %v1187 = vpack.c.b16 %v695, %v691
    %v1188 = vpack.c.b16 %v700, %v696
    %v1189 = vpack.c.b16 %v701, %v697
    %v1190 = vpack.c.b16 %v702, %v698
    %v1191 = vpack.c.b16 %v703, %v699
    %v1192 = vpack.c.b16 %v708, %v704
    %v1193 = vpack.c.b16 %v709, %v705
    %v1194 = vpack.c.b16 %v710, %v706
    %v1195 = vpack.c.b16 %v711, %v707
    %v1196 = vpack.c.b16 %v716, %v712
    %v1197 = vpack.c.b16 %v717, %v713
    %v1198 = vpack.c.b16 %v718, %v714
    %v1199 = vpack.c.b16 %v719, %v715
    %v1200 = vpack.c.b16 %v724, %v720
    %v1201 = vpack.c.b16 %v725, %v721
    %v1202 = vpack.c.b16 %v726, %v722
    %v1203 = vpack.c.b16 %v727, %v723
    %v1204 = vpack.c.b16 %v732, %v728
    %v1205 = vpack.c.b16 %v733, %v729
    %v1206 = vpack.c.b16 %v734, %v730
    %v1207 = vpack.c.b16 %v735, %v731
    %v1208 = vpack.c.b16 %v740, %v736
    %v1209 = vpack.c.b16 %v741, %v737
    %v1210 = vpack.c.b16 %v742, %v738
    %v1211 = vpack.c.b16 %v743, %v739
    %v1212 = vpack.c.b16 %v748, %v744
    %v1213 = vpack.c.b16 %v749, %v745
    %v1214 = vpack.c.b16 %v750, %v746
    %v1215 = vpack.c.b16 %v751, %v747
    %v1216 = vpack.c.b16 %v756, %v752
    %v1217 = vpack.c.b16 %v757, %v753
    %v1218 = vpack.c.b16 %v758, %v754
    %v1219 = vpack.c.b16 %v759, %v755
    %v1220 = vpack.c.b16 %v764, %v760
    %v1221 = vpack.c.b16 %v765, %v761
    %v1222 = vpack.c.b16 %v766, %v762
    %v1223 = vpack.c.b16 %v767, %v763
    %v1224 = vpack.c.b16 %v772, %v768
    %v1225 = vpack.c.b16 %v773, %v769
    %v1226 = vpack.c.b16 %v774, %v770
    %v1227 = vpack.c.b16 %v775, %v771
    %v1228 = vpack.c.b16 %v780, %v776
    %v1229 = vpack.c.b16 %v781, %v777
    %v1230 = vpack.c.b16 %v782, %v778
    %v1231 = vpack.c.b16 %v783, %v779
    %v1232 = vpack.c.b16 %v788, %v784
    %v1233 = vpack.c.b16 %v789, %v785
    %v1234 = vpack.c.b16 %v790, %v786
    %v1235 = vpack.c.b16 %v791, %v787
    %v1236 = vpack.c.b16 %v796, %v792
    %v1237 = vpack.c.b16 %v797, %v793
    %v1238 = vpack.c.b16 %v798, %v794
    %v1239 = vpack.c.b16 %v799, %v795
    %v1240 = vpack.c.b16 %v804, %v800
    %v1241 = vpack.c.b16 %v805, %v801
    %v1242 = vpack.c.b16 %v806, %v802
    %v1243 = vpack.c.b16 %v807, %v803
    %v1244 = vpack.c.b16 %v812, %v808
    %v1245 = vpack.c.b16 %v813, %v809
    %v1246 = vpack.c.b16 %v814, %v810
    %v1247 = vpack.c.b16 %v815, %v811
    %v1248 = vpack.c.b16 %v820, %v816
    %v1249 = vpack.c.b16 %v821, %v817
    %v1250 = vpack.c.b16 %v822, %v818
    %v1251 = vpack.c.b16 %v823, %v819
    %v1252 = vpack.c.b16 %v828, %v824
    %v1253 = vpack.c.b16 %v829, %v825
    %v1254 = vpack.c.b16 %v830, %v826
    %v1255 = vpack.c.b16 %v831, %v827
    %v1256 = vpack.c.b16 %v836, %v832
    %v1257 = vpack.c.b16 %v837, %v833
    %v1258 = vpack.c.b16 %v838, %v834
    %v1259 = vpack.c.b16 %v839, %v835
    %v1260 = vpack.c.b16 %v844, %v840
    %v1261 = vpack.c.b16 %v845, %v841
    %v1262 = vpack.c.b16 %v846, %v842
    %v1263 = vpack.c.b16 %v847, %v843
    %v1264 = vpack.c.b16 %v852, %v848
    %v1265 = vpack.c.b16 %v853, %v849
    %v1266 = vpack.c.b16 %v854, %v850
    %v1267 = vpack.c.b16 %v855, %v851
    %v1268 = vpack.c.b16 %v860, %v856
    %v1269 = vpack.c.b16 %v861, %v857
    %v1270 = vpack.c.b16 %v862, %v858
    %v1271 = vpack.c.b16 %v863, %v859
    %v1272 = vpack.c.b16 %v868, %v864
    %v1273 = vpack.c.b16 %v869, %v865
    %v1274 = vpack.c.b16 %v870, %v866
    %v1275 = vpack.c.b16 %v871, %v867
    %v1276 = vpack.c.b16 %v876, %v872
    %v1277 = vpack.c.b16 %v877, %v873
    %v1278 = vpack.c.b16 %v878, %v874
    %v1279 = vpack.c.b16 %v879, %v875
    %v1280 = vpack.c.b16 %v884, %v880
    %v1281 = vpack.c.b16 %v885, %v881
    %v1282 = vpack.c.b16 %v886, %v882
    %v1283 = vpack.c.b16 %v887, %v883
    %v1284 = vpack.c.b16 %v892, %v888
    %v1285 = vpack.c.b16 %v893, %v889
    %v1286 = vpack.c.b16 %v894, %v890
    %v1287 = vpack.c.b16 %v895, %v891
    %v1288 = vpack.c.b16 %v900, %v896
    %v1289 = vpack.c.b16 %v901, %v897
    %v1290 = vpack.c.b16 %v902, %v898
    %v1291 = vpack.c.b16 %v903, %v899
    %v1292 = vpack.c.b16 %v908, %v904
    %v1293 = vpack.c.b16 %v909, %v905
    %v1294 = vpack.c.b16 %v910, %v906
    %v1295 = vpack.c.b16 %v911, %v907
    %v1296 = vpack.c.b16 %v916, %v912
    %v1297 = vpack.c.b16 %v917, %v913
    %v1298 = vpack.c.b16 %v918, %v914
    %v1299 = vpack.c.b16 %v919, %v915
    %v1300 = vpack.c.b16 %v924, %v920
    %v1301 = vpack.c.b16 %v925, %v921
    %v1302 = vpack.c.b16 %v926, %v922
    %v1303 = vpack.c.b16 %v927, %v923
    %v1304 = vpack.c.b16 %v932, %v928
    %v1305 = vpack.c.b16 %v933, %v929
    %v1306 = vpack.c.b16 %v934, %v930
    %v1307 = vpack.c.b16 %v935, %v931
    %v1308 = vpack.c.b16 %v940, %v936
    %v1309 = vpack.c.b16 %v941, %v937
    %v1310 = vpack.c.b16 %v942, %v938
    %v1311 = vpack.c.b16 %v943, %v939
    %v1312 = vpack.c.b16 %v948, %v944
    %v1313 = vpack.c.b16 %v949, %v945
    %v1314 = vpack.c.b16 %v950, %v946
    %v1315 = vpack.c.b16 %v951, %v947
    %v1316 = vpack.c.b16 %v956, %v952
    %v1317 = vpack.c.b16 %v957, %v953
    %v1318 = vpack.c.b16 %v958, %v954
    %v1319 = vpack.c.b16 %v959, %v955
    %v1320 = vpack.c.b16 %v964, %v960
    %v1321 = vpack.c.b16 %v965, %v961
    %v1322 = vpack.c.b16 %v966, %v962
    %v1323 = vpack.c.b16 %v967, %v963
    %v1324 = vpack.c.b16 %v972, %v968
    %v1325 = vpack.c.b16 %v973, %v969
    %v1326 = vpack.c.b16 %v974, %v970
    %v1327 = vpack.c.b16 %v975, %v971
    %v1328 = vpack.c.b16 %v980, %v976
    %v1329 = vpack.c.b16 %v981, %v977
    %v1330 = vpack.c.b16 %v982, %v978
    %v1331 = vpack.c.b16 %v983, %v979
    %v1332 = vpack.c.b16 %v988, %v984
    %v1333 = vpack.c.b16 %v989, %v985
    %v1334 = vpack.c.b16 %v990, %v986
    %v1335 = vpack.c.b16 %v991, %v987
    %v1336 = vpack.c.b16 %v996, %v992
    %v1337 = vpack.c.b16 %v997, %v993
    %v1338 = vpack.c.b16 %v998, %v994
    %v1339 = vpack.c.b16 %v999, %v995
    %v1340 = vpack.c.b16 %v1004, %v1000
    %v1341 = vpack.c.b16 %v1005, %v1001
    %v1342 = vpack.c.b16 %v1006, %v1002
    %v1343 = vpack.c.b16 %v1007, %v1003
    %v1344 = vpack.c.b16 %v1012, %v1008
    %v1345 = vpack.c.b16 %v1013, %v1009
    %v1346 = vpack.c.b16 %v1014, %v1010
    %v1347 = vpack.c.b16 %v1015, %v1011
    %v1348 = vpack.c.b16 %v1020, %v1016
    %v1349 = vpack.c.b16 %v1021, %v1017
    %v1350 = vpack.c.b16 %v1022, %v1018
    %v1351 = vpack.c.b16 %v1023, %v1019
    %v1352 = vpack.c.b16 %v1028, %v1024
    %v1353 = vpack.c.b16 %v1029, %v1025
    %v1354 = vpack.c.b16 %v1030, %v1026
    %v1355 = vpack.c.b16 %v1031, %v1027
    %v1356 = vpack.c.b16 %v1036, %v1032
    %v1357 = vpack.c.b16 %v1037, %v1033
    %v1358 = vpack.c.b16 %v1038, %v1034
    %v1359 = vpack.c.b16 %v1039, %v1035
    %v1360 = vpack.c.b16 %v1044, %v1040
    %v1361 = vpack.c.b16 %v1045, %v1041
    %v1362 = vpack.c.b16 %v1046, %v1042
    %v1363 = vpack.c.b16 %v1047, %v1043
    %v1364 = vpack.c.b16 %v1052, %v1048
    %v1365 = vpack.c.b16 %v1053, %v1049
    %v1366 = vpack.c.b16 %v1054, %v1050
    %v1367 = vpack.c.b16 %v1055, %v1051
    %v1368 = vpack.c.b16 %v1060, %v1056
    %v1369 = vpack.c.b16 %v1061, %v1057
    %v1370 = vpack.c.b16 %v1062, %v1058
    %v1371 = vpack.c.b16 %v1063, %v1059
    %v1372 = vpack.c.b16 %v1068, %v1064
    %v1373 = vpack.c.b16 %v1069, %v1065
    %v1374 = vpack.c.b16 %v1070, %v1066
    %v1375 = vpack.c.b16 %v1071, %v1067
    %v1376 = vpack.c.b16 %v1076, %v1072
    %v1377 = vpack.c.b16 %v1077, %v1073
    %v1378 = vpack.c.b16 %v1078, %v1074
    %v1379 = vpack.c.b16 %v1079, %v1075
    %v1380 = vpack.c.b16 %v1084, %v1080
    %v1381 = vpack.c.b16 %v1085, %v1081
    %v1382 = vpack.c.b16 %v1086, %v1082
    %v1383 = vpack.c.b16 %v1087, %v1083
    %v1384 = vpack.c.b16 %v1092, %v1088
    %v1385 = vpack.c.b16 %v1093, %v1089
    %v1386 = vpack.c.b16 %v1094, %v1090
    %v1387 = vpack.c.b16 %v1095, %v1091
    %v1388 = vpack.c.b16 %v1100, %v1096
    %v1389 = vpack.c.b16 %v1101, %v1097
    %v1390 = vpack.c.b16 %v1102, %v1098
    %v1391 = vpack.c.b16 %v1103, %v1099
    %v1392 = vpack.c.b16 %v1108, %v1104
    %v1393 = vpack.c.b16 %v1109, %v1105
    %v1394 = vpack.c.b16 %v1110, %v1106
    %v1395 = vpack.c.b16 %v1111, %v1107
    %v1396 = vpack.c.b16 %v1116, %v1112
    %v1397 = vpack.c.b16 %v1117, %v1113
    %v1398 = vpack.c.b16 %v1118, %v1114
    %v1399 = vpack.c.b16 %v1119, %v1115
    %v1400 = vpack.c.b16 %v1124, %v1120
    %v1401 = vpack.c.b16 %v1125, %v1121
    %v1402 = vpack.c.b16 %v1126, %v1122
    %v1403 = vpack.c.b16 %v1127, %v1123
    %v1404 = vpack.c.b16 %v1132, %v1128
    %v1405 = vpack.c.b16 %v1133, %v1129
    %v1406 = vpack.c.b16 %v1134, %v1130
    %v1407 = vpack.c.b16 %v1135, %v1131
    %v1408 = vpack.c.b16 %v1140, %v1136
    %v1409 = vpack.c.b16 %v1141, %v1137
    %v1410 = vpack.c.b16 %v1142, %v1138
    %v1411 = vpack.c.b16 %v1143, %v1139
    %v1412 = vpack.c.b16 %v1148, %v1144
    %v1413 = vpack.c.b16 %v1149, %v1145
    %v1414 = vpack.c.b16 %v1150, %v1146
    %v1415 = vpack.c.b16 %v1151, %v1147
    %v1416 = vpack.c.b16 %v1156, %v1152
    %v1417 = vpack.c.b16 %v1157, %v1153
    %v1418 = vpack.c.b16 %v1158, %v1154
    %v1419 = vpack.c.b16 %v1159, %v1155
    %v1420 = vpack.c.b16 %v1164, %v1160
    %v1421 = vpack.c.b16 %v1165, %v1161
    %v1422 = vpack.c.b16 %v1166, %v1162
    %v1423 = vpack.c.b16 %v1167, %v1163
    %1680 = vmatprep.subr.bf16.mxu0 %v1169
    %1681 = vmatpush1.bf16.msra.mxu0 %v1168
    %1682 = vmatprep.subr.bf16.mxu0 %v1173
    %1683 = vmatpush1.bf16.msra.mxu0 %v1172
    %1684 = vmatprep.subr.bf16.mxu0 %v1177
    %1685 = vmatpush1.bf16.msra.mxu0 %v1176
    %1686 = vmatprep.subr.bf16.mxu0 %v1181
    %1687 = vmatpush1.bf16.msra.mxu0 %v1180
    %1688 = vmatprep.subr.bf16.mxu0 %v1185
    %1689 = vmatpush1.bf16.msra.mxu0 %v1184
    %1690 = vmatprep.subr.bf16.mxu0 %v1189
    %1691 = vmatpush1.bf16.msra.mxu0 %v1188
    %1692 = vmatprep.subr.bf16.mxu0 %v1193
    %1693 = vmatpush1.bf16.msra.mxu0 %v1192
    %1694 = vmatprep.subr.bf16.mxu0 %v1197
    %1695 = vmatpush1.bf16.msra.mxu0 %v1196
    %1696 = vmatprep.subr.bf16.mxu0 %v1201
    %1697 = vmatpush1.bf16.msra.mxu0 %v1200
    %1698 = vmatprep.subr.bf16.mxu0 %v1205
    %1699 = vmatpush1.bf16.msra.mxu0 %v1204
    %1700 = vmatprep.subr.bf16.mxu0 %v1209
    %1701 = vmatpush1.bf16.msra.mxu0 %v1208
    %1702 = vmatprep.subr.bf16.mxu0 %v1213
    %1703 = vmatpush1.bf16.msra.mxu0 %v1212
    %1704 = vmatprep.subr.bf16.mxu0 %v1217
    %1705 = vmatpush1.bf16.msra.mxu0 %v1216
    %1706 = vmatprep.subr.bf16.mxu0 %v1221
    %1707 = vmatpush1.bf16.msra.mxu0 %v1220
    %1708 = vmatprep.subr.bf16.mxu0 %v1225
    %1709 = vmatpush1.bf16.msra.mxu0 %v1224
    %1710 = vmatprep.subr.bf16.mxu0 %v1229
    %1711 = vmatpush1.bf16.msra.mxu0 %v1228
    %1712 = vmatprep.mubr.bf16.mxu0 %v385
    %1713 = vmatmul.mubr.bf16.gmra.mrb[0].mxu0 %v384
    %v1714 = vpop.f32.mrb[0].mxu0
    %v1715 = vadd.f32 0.0, %v1714
    %v1716 = vpop.f32.mrb[0].mxu0
    %v1717 = vadd.f32 0.0, %v1716
    %v1718 = vpop.f32.mrb[0].mxu0
    %v1719 = vadd.f32 0.0, %v1718
    %v1720 = vpop.f32.mrb[0].mxu0
    %v1721 = vadd.f32 0.0, %v1720
    %1722 = vdwg.mxu0
    %1723 = vmatprep.subr.bf16.mxu0 %v1233
    %1724 = vmatpush1.bf16.msra.mxu0 %v1232
    %1725 = vmatprep.subr.bf16.mxu0 %v1237
    %1726 = vmatpush1.bf16.msra.mxu0 %v1236
    %1727 = vmatprep.subr.bf16.mxu0 %v1241
    %1728 = vmatpush1.bf16.msra.mxu0 %v1240
    %1729 = vmatprep.subr.bf16.mxu0 %v1245
    %1730 = vmatpush1.bf16.msra.mxu0 %v1244
    %1731 = vmatprep.subr.bf16.mxu0 %v1249
    %1732 = vmatpush1.bf16.msra.mxu0 %v1248
    %1733 = vmatprep.subr.bf16.mxu0 %v1253
    %1734 = vmatpush1.bf16.msra.mxu0 %v1252
    %1735 = vmatprep.subr.bf16.mxu0 %v1257
    %1736 = vmatpush1.bf16.msra.mxu0 %v1256
    %1737 = vmatprep.subr.bf16.mxu0 %v1261
    %1738 = vmatpush1.bf16.msra.mxu0 %v1260
    %1739 = vmatprep.subr.bf16.mxu0 %v1265
    %1740 = vmatpush1.bf16.msra.mxu0 %v1264
    %1741 = vmatprep.subr.bf16.mxu0 %v1269
    %1742 = vmatpush1.bf16.msra.mxu0 %v1268
    %1743 = vmatprep.subr.bf16.mxu0 %v1273
    %1744 = vmatpush1.bf16.msra.mxu0 %v1272
    %1745 = vmatprep.subr.bf16.mxu0 %v1277
    %1746 = vmatpush1.bf16.msra.mxu0 %v1276
    %1747 = vmatprep.subr.bf16.mxu0 %v1281
    %1748 = vmatpush1.bf16.msra.mxu0 %v1280
    %1749 = vmatprep.subr.bf16.mxu0 %v1285
    %1750 = vmatpush1.bf16.msra.mxu0 %v1284
    %1751 = vmatprep.subr.bf16.mxu0 %v1289
    %1752 = vmatpush1.bf16.msra.mxu0 %v1288
    %1753 = vmatprep.subr.bf16.mxu0 %v1293
    %1754 = vmatpush1.bf16.msra.mxu0 %v1292
    %1755 = vmatprep.mubr.bf16.mxu0 %v387
    %1756 = vmatmul.mubr.bf16.gmra.mrb[0].mxu0 %v386
    %v1757 = vpop.f32.mrb[0].mxu0
    %v1758 = vadd.f32 %v1715, %v1757
    %v1759 = vpop.f32.mrb[0].mxu0
    %v1760 = vadd.f32 %v1717, %v1759
    %v1761 = vpop.f32.mrb[0].mxu0
    %v1762 = vadd.f32 %v1719, %v1761
    %v1763 = vpop.f32.mrb[0].mxu0
    %v1764 = vadd.f32 %v1721, %v1763
    %1765 = vdwg.mxu0
    %1766 = vmatprep.subr.bf16.mxu0 %v1297
    %1767 = vmatpush1.bf16.msra.mxu0 %v1296
    %1768 = vmatprep.subr.bf16.mxu0 %v1301
    %1769 = vmatpush1.bf16.msra.mxu0 %v1300
    %1770 = vmatprep.subr.bf16.mxu0 %v1305
    %1771 = vmatpush1.bf16.msra.mxu0 %v1304
    %1772 = vmatprep.subr.bf16.mxu0 %v1309
    %1773 = vmatpush1.bf16.msra.mxu0 %v1308
    %1774 = vmatprep.subr.bf16.mxu0 %v1313
    %1775 = vmatpush1.bf16.msra.mxu0 %v1312
    %1776 = vmatprep.subr.bf16.mxu0 %v1317
    %1777 = vmatpush1.bf16.msra.mxu0 %v1316
    %1778 = vmatprep.subr.bf16.mxu0 %v1321
    %1779 = vmatpush1.bf16.msra.mxu0 %v1320
    %1780 = vmatprep.subr.bf16.mxu0 %v1325
    %1781 = vmatpush1.bf16.msra.mxu0 %v1324
    %1782 = vmatprep.subr.bf16.mxu0 %v1329
    %1783 = vmatpush1.bf16.msra.mxu0 %v1328
    %1784 = vmatprep.subr.bf16.mxu0 %v1333
    %1785 = vmatpush1.bf16.msra.mxu0 %v1332
    %1786 = vmatprep.subr.bf16.mxu0 %v1337
    %1787 = vmatpush1.bf16.msra.mxu0 %v1336
    %1788 = vmatprep.subr.bf16.mxu0 %v1341
    %1789 = vmatpush1.bf16.msra.mxu0 %v1340
    %1790 = vmatprep.subr.bf16.mxu0 %v1345
    %1791 = vmatpush1.bf16.msra.mxu0 %v1344
    %1792 = vmatprep.subr.bf16.mxu0 %v1349
    %1793 = vmatpush1.bf16.msra.mxu0 %v1348
    %1794 = vmatprep.subr.bf16.mxu0 %v1353
    %1795 = vmatpush1.bf16.msra.mxu0 %v1352
    %1796 = vmatprep.subr.bf16.mxu0 %v1357
    %1797 = vmatpush1.bf16.msra.mxu0 %v1356
    %1798 = vmatprep.mubr.bf16.mxu0 %v389
    %1799 = vmatmul.mubr.bf16.gmra.mrb[0].mxu0 %v388
    %v1800 = vpop.f32.mrb[0].mxu0
    %v1801 = vadd.f32 %v1758, %v1800
    %v1802 = vpop.f32.mrb[0].mxu0
    %v1803 = vadd.f32 %v1760, %v1802
    %v1804 = vpop.f32.mrb[0].mxu0
    %v1805 = vadd.f32 %v1762, %v1804
    %v1806 = vpop.f32.mrb[0].mxu0
    %v1807 = vadd.f32 %v1764, %v1806
    %1808 = vdwg.mxu0
    %1809 = vmatprep.subr.bf16.mxu0 %v1361
    %1810 = vmatpush1.bf16.msra.mxu0 %v1360
    %1811 = vmatprep.subr.bf16.mxu0 %v1365
    %1812 = vmatpush1.bf16.msra.mxu0 %v1364
    %1813 = vmatprep.subr.bf16.mxu0 %v1369
    %1814 = vmatpush1.bf16.msra.mxu0 %v1368
    %1815 = vmatprep.subr.bf16.mxu0 %v1373
    %1816 = vmatpush1.bf16.msra.mxu0 %v1372
    %1817 = vmatprep.subr.bf16.mxu0 %v1377
    %1818 = vmatpush1.bf16.msra.mxu0 %v1376
    %1819 = vmatprep.subr.bf16.mxu0 %v1381
    %1820 = vmatpush1.bf16.msra.mxu0 %v1380
    %1821 = vmatprep.subr.bf16.mxu0 %v1385
    %1822 = vmatpush1.bf16.msra.mxu0 %v1384
    %1823 = vmatprep.subr.bf16.mxu0 %v1389
    %1824 = vmatpush1.bf16.msra.mxu0 %v1388
    %1825 = vmatprep.subr.bf16.mxu0 %v1393
    %1826 = vmatpush1.bf16.msra.mxu0 %v1392
    %1827 = vmatprep.subr.bf16.mxu0 %v1397
    %1828 = vmatpush1.bf16.msra.mxu0 %v1396
    %1829 = vmatprep.subr.bf16.mxu0 %v1401
    %1830 = vmatpush1.bf16.msra.mxu0 %v1400
    %1831 = vmatprep.subr.bf16.mxu0 %v1405
    %1832 = vmatpush1.bf16.msra.mxu0 %v1404
    %1833 = vmatprep.subr.bf16.mxu0 %v1409
    %1834 = vmatpush1.bf16.msra.mxu0 %v1408
    %1835 = vmatprep.subr.bf16.mxu0 %v1413
    %1836 = vmatpush1.bf16.msra.mxu0 %v1412
    %1837 = vmatprep.subr.bf16.mxu0 %v1417
    %1838 = vmatpush1.bf16.msra.mxu0 %v1416
    %1839 = vmatprep.subr.bf16.mxu0 %v1421
    %1840 = vmatpush1.bf16.msra.mxu0 %v1420
    %1841 = vmatprep.mubr.bf16.mxu0 %v391
    %1842 = vmatmul.mubr.bf16.gmra.mrb[0].mxu0 %v390
    %v1843 = vpop.f32.mrb[0].mxu0
    %v1844 = vadd.f32 %v1801, %v1843
    %v1845 = vpop.f32.mrb[0].mxu0
    %v1846 = vadd.f32 %v1803, %v1845
    %v1847 = vpop.f32.mrb[0].mxu0
    %v1848 = vadd.f32 %v1805, %v1847
    %v1849 = vpop.f32.mrb[0].mxu0
    %v1850 = vadd.f32 %v1807, %v1849
    %1851 = vdwg.mxu0
    %1852 = vmatprep.subr.bf16.mxu0 %v1171
    %1853 = vmatpush1.bf16.msra.mxu0 %v1170
    %1854 = vmatprep.subr.bf16.mxu0 %v1175
    %1855 = vmatpush1.bf16.msra.mxu0 %v1174
    %1856 = vmatprep.subr.bf16.mxu0 %v1179
    %1857 = vmatpush1.bf16.msra.mxu0 %v1178
    %1858 = vmatprep.subr.bf16.mxu0 %v1183
    %1859 = vmatpush1.bf16.msra.mxu0 %v1182
    %1860 = vmatprep.subr.bf16.mxu0 %v1187
    %1861 = vmatpush1.bf16.msra.mxu0 %v1186
    %1862 = vmatprep.subr.bf16.mxu0 %v1191
    %1863 = vmatpush1.bf16.msra.mxu0 %v1190
    %1864 = vmatprep.subr.bf16.mxu0 %v1195
    %1865 = vmatpush1.bf16.msra.mxu0 %v1194
    %1866 = vmatprep.subr.bf16.mxu0 %v1199
    %1867 = vmatpush1.bf16.msra.mxu0 %v1198
    %1868 = vmatprep.subr.bf16.mxu0 %v1203
    %1869 = vmatpush1.bf16.msra.mxu0 %v1202
    %1870 = vmatprep.subr.bf16.mxu0 %v1207
    %1871 = vmatpush1.bf16.msra.mxu0 %v1206
    %1872 = vmatprep.subr.bf16.mxu0 %v1211
    %1873 = vmatpush1.bf16.msra.mxu0 %v1210
    %1874 = vmatprep.subr.bf16.mxu0 %v1215
    %1875 = vmatpush1.bf16.msra.mxu0 %v1214
    %1876 = vmatprep.subr.bf16.mxu0 %v1219
    %1877 = vmatpush1.bf16.msra.mxu0 %v1218
    %1878 = vmatprep.subr.bf16.mxu0 %v1223
    %1879 = vmatpush1.bf16.msra.mxu0 %v1222
    %1880 = vmatprep.subr.bf16.mxu0 %v1227
    %1881 = vmatpush1.bf16.msra.mxu0 %v1226
    %1882 = vmatprep.subr.bf16.mxu0 %v1231
    %1883 = vmatpush1.bf16.msra.mxu0 %v1230
    %1884 = vmatprep.mubr.bf16.mxu0 %v385
    %1885 = vmatmul.mubr.bf16.gmra.mrb[0].mxu0 %v384
    %v1886 = vpop.f32.mrb[0].mxu0
    %v1887 = vadd.f32 0.0, %v1886
    %v1888 = vpop.f32.mrb[0].mxu0
    %v1889 = vadd.f32 0.0, %v1888
    %v1890 = vpop.f32.mrb[0].mxu0
    %v1891 = vadd.f32 0.0, %v1890
    %v1892 = vpop.f32.mrb[0].mxu0
    %v1893 = vadd.f32 0.0, %v1892
    %1894 = vdwg.mxu0
    %1895 = vmatprep.subr.bf16.mxu0 %v1235
    %1896 = vmatpush1.bf16.msra.mxu0 %v1234
    %1897 = vmatprep.subr.bf16.mxu0 %v1239
    %1898 = vmatpush1.bf16.msra.mxu0 %v1238
    %1899 = vmatprep.subr.bf16.mxu0 %v1243
    %1900 = vmatpush1.bf16.msra.mxu0 %v1242
    %1901 = vmatprep.subr.bf16.mxu0 %v1247
    %1902 = vmatpush1.bf16.msra.mxu0 %v1246
    %1903 = vmatprep.subr.bf16.mxu0 %v1251
    %1904 = vmatpush1.bf16.msra.mxu0 %v1250
    %1905 = vmatprep.subr.bf16.mxu0 %v1255
    %1906 = vmatpush1.bf16.msra.mxu0 %v1254
    %1907 = vmatprep.subr.bf16.mxu0 %v1259
    %1908 = vmatpush1.bf16.msra.mxu0 %v1258
    %1909 = vmatprep.subr.bf16.mxu0 %v1263
    %1910 = vmatpush1.bf16.msra.mxu0 %v1262
    %1911 = vmatprep.subr.bf16.mxu0 %v1267
    %1912 = vmatpush1.bf16.msra.mxu0 %v1266
    %1913 = vmatprep.subr.bf16.mxu0 %v1271
    %1914 = vmatpush1.bf16.msra.mxu0 %v1270
    %1915 = vmatprep.subr.bf16.mxu0 %v1275
    %1916 = vmatpush1.bf16.msra.mxu0 %v1274
    %1917 = vmatprep.subr.bf16.mxu0 %v1279
    %1918 = vmatpush1.bf16.msra.mxu0 %v1278
    %1919 = vmatprep.subr.bf16.mxu0 %v1283
    %1920 = vmatpush1.bf16.msra.mxu0 %v1282
    %1921 = vmatprep.subr.bf16.mxu0 %v1287
    %1922 = vmatpush1.bf16.msra.mxu0 %v1286
    %1923 = vmatprep.subr.bf16.mxu0 %v1291
    %1924 = vmatpush1.bf16.msra.mxu0 %v1290
    %1925 = vmatprep.subr.bf16.mxu0 %v1295
    %1926 = vmatpush1.bf16.msra.mxu0 %v1294
    %1927 = vmatprep.mubr.bf16.mxu0 %v387
    %1928 = vmatmul.mubr.bf16.gmra.mrb[0].mxu0 %v386
    %v1929 = vpop.f32.mrb[0].mxu0
    %v1930 = vadd.f32 %v1887, %v1929
    %v1931 = vpop.f32.mrb[0].mxu0
    %v1932 = vadd.f32 %v1889, %v1931
    %v1933 = vpop.f32.mrb[0].mxu0
    %v1934 = vadd.f32 %v1891, %v1933
    %v1935 = vpop.f32.mrb[0].mxu0
    %v1936 = vadd.f32 %v1893, %v1935
    %1937 = vdwg.mxu0
    %1938 = vmatprep.subr.bf16.mxu0 %v1299
    %1939 = vmatpush1.bf16.msra.mxu0 %v1298
    %1940 = vmatprep.subr.bf16.mxu0 %v1303
    %1941 = vmatpush1.bf16.msra.mxu0 %v1302
    %1942 = vmatprep.subr.bf16.mxu0 %v1307
    %1943 = vmatpush1.bf16.msra.mxu0 %v1306
    %1944 = vmatprep.subr.bf16.mxu0 %v1311
    %1945 = vmatpush1.bf16.msra.mxu0 %v1310
    %1946 = vmatprep.subr.bf16.mxu0 %v1315
    %1947 = vmatpush1.bf16.msra.mxu0 %v1314
    %1948 = vmatprep.subr.bf16.mxu0 %v1319
    %1949 = vmatpush1.bf16.msra.mxu0 %v1318
    %1950 = vmatprep.subr.bf16.mxu0 %v1323
    %1951 = vmatpush1.bf16.msra.mxu0 %v1322
    %1952 = vmatprep.subr.bf16.mxu0 %v1327
    %1953 = vmatpush1.bf16.msra.mxu0 %v1326
    %1954 = vmatprep.subr.bf16.mxu0 %v1331
    %1955 = vmatpush1.bf16.msra.mxu0 %v1330
    %1956 = vmatprep.subr.bf16.mxu0 %v1335
    %1957 = vmatpush1.bf16.msra.mxu0 %v1334
    %1958 = vmatprep.subr.bf16.mxu0 %v1339
    %1959 = vmatpush1.bf16.msra.mxu0 %v1338
    %1960 = vmatprep.subr.bf16.mxu0 %v1343
    %1961 = vmatpush1.bf16.msra.mxu0 %v1342
    %1962 = vmatprep.subr.bf16.mxu0 %v1347
    %1963 = vmatpush1.bf16.msra.mxu0 %v1346
    %1964 = vmatprep.subr.bf16.mxu0 %v1351
    %1965 = vmatpush1.bf16.msra.mxu0 %v1350
    %1966 = vmatprep.subr.bf16.mxu0 %v1355
    %1967 = vmatpush1.bf16.msra.mxu0 %v1354
    %1968 = vmatprep.subr.bf16.mxu0 %v1359
    %1969 = vmatpush1.bf16.msra.mxu0 %v1358
    %1970 = vmatprep.mubr.bf16.mxu0 %v389
    %1971 = vmatmul.mubr.bf16.gmra.mrb[0].mxu0 %v388
    %v1972 = vpop.f32.mrb[0].mxu0
    %v1973 = vadd.f32 %v1930, %v1972
    %v1974 = vpop.f32.mrb[0].mxu0
    %v1975 = vadd.f32 %v1932, %v1974
    %v1976 = vpop.f32.mrb[0].mxu0
    %v1977 = vadd.f32 %v1934, %v1976
    %v1978 = vpop.f32.mrb[0].mxu0
    %v1979 = vadd.f32 %v1936, %v1978
    %1980 = vdwg.mxu0
    %1981 = vmatprep.subr.bf16.mxu0 %v1363
    %1982 = vmatpush1.bf16.msra.mxu0 %v1362
    %1983 = vmatprep.subr.bf16.mxu0 %v1367
    %1984 = vmatpush1.bf16.msra.mxu0 %v1366
    %1985 = vmatprep.subr.bf16.mxu0 %v1371
    %1986 = vmatpush1.bf16.msra.mxu0 %v1370
    %1987 = vmatprep.subr.bf16.mxu0 %v1375
    %1988 = vmatpush1.bf16.msra.mxu0 %v1374
    %1989 = vmatprep.subr.bf16.mxu0 %v1379
    %1990 = vmatpush1.bf16.msra.mxu0 %v1378
    %1991 = vmatprep.subr.bf16.mxu0 %v1383
    %1992 = vmatpush1.bf16.msra.mxu0 %v1382
    %1993 = vmatprep.subr.bf16.mxu0 %v1387
    %1994 = vmatpush1.bf16.msra.mxu0 %v1386
    %1995 = vmatprep.subr.bf16.mxu0 %v1391
    %1996 = vmatpush1.bf16.msra.mxu0 %v1390
    %1997 = vmatprep.subr.bf16.mxu0 %v1395
    %1998 = vmatpush1.bf16.msra.mxu0 %v1394
    %1999 = vmatprep.subr.bf16.mxu0 %v1399
    %2000 = vmatpush1.bf16.msra.mxu0 %v1398
    %2001 = vmatprep.subr.bf16.mxu0 %v1403
    %2002 = vmatpush1.bf16.msra.mxu0 %v1402
    %2003 = vmatprep.subr.bf16.mxu0 %v1407
    %2004 = vmatpush1.bf16.msra.mxu0 %v1406
    %2005 = vmatprep.subr.bf16.mxu0 %v1411
    %2006 = vmatpush1.bf16.msra.mxu0 %v1410
    %2007 = vmatprep.subr.bf16.mxu0 %v1415
    %2008 = vmatpush1.bf16.msra.mxu0 %v1414
    %2009 = vmatprep.subr.bf16.mxu0 %v1419
    %2010 = vmatpush1.bf16.msra.mxu0 %v1418
    %2011 = vmatprep.subr.bf16.mxu0 %v1423
    %2012 = vmatpush1.bf16.msra.mxu0 %v1422
    %2013 = vmatprep.mubr.bf16.mxu0 %v391
    %2014 = vmatmul.mubr.bf16.gmra.mrb[0].mxu0 %v390
    %v2015 = vpop.f32.mrb[0].mxu0
    %v2016 = vadd.f32 %v1973, %v2015
    %v2017 = vpop.f32.mrb[0].mxu0
    %v2018 = vadd.f32 %v1975, %v2017
    %v2019 = vpop.f32.mrb[0].mxu0
    %v2020 = vadd.f32 %v1977, %v2019
    %v2021 = vpop.f32.mrb[0].mxu0
    %v2022 = vadd.f32 %v1979, %v2021
    %2023 = vdwg.mxu0
    %v2024 = vadd.f32 %v88, %v1844
    %v2025 = vadd.f32 %v89, %v1846
    %v2026 = vadd.f32 %v90, %v2016
    %v2027 = vadd.f32 %v91, %v2018
    %v2028 = vadd.f32 %v92, %v1848
    %v2029 = vadd.f32 %v93, %v1850
    %v2030 = vadd.f32 %v94, %v2020
    %v2031 = vadd.f32 %v95, %v2022
    %2032 = vst [vmem:[%s87] sm:$0xff] %v2024
    %2033 = vst [vmem:[%s87 + $0x8] sm:$0xff] %v2025
    %2034 = vst [vmem:[%s87 + $0x10] sm:$0xff] %v2026
    %2035 = vst [vmem:[%s87 + $0x18] sm:$0xff] %v2027
    %2036 = vst [vmem:[%s87 + $0x20] sm:$0xff] %v2028
    %2037 = vst [vmem:[%s87 + $0x28] sm:$0xff] %v2029
    %2038 = vst [vmem:[%s87 + $0x30] sm:$0xff] %v2030
    %2039 = vst [vmem:[%s87 + $0x38] sm:$0xff] %v2031
    // Predicated region
    $region46: #{tpu_custom_call.1} parent=1 // pred_check
      %p2040 = pneg %p70
    $region47: #{tpu_custom_call.1} parent=1 // pred_check_branch
      %2042 = sbr.rel (%p2040) target = $region49
    $region48: #{tpu_custom_call.1} parent=1 // pred_region
      %v2043 = vld [vmem:[%s87] sm:$0xff]
      %v2044 = vld [vmem:[%s87 + $0x8] sm:$0xff]
      %v2045 = vld [vmem:[%s87 + $0x10] sm:$0xff]
      %v2046 = vld [vmem:[%s87 + $0x18] sm:$0xff]
      %v2047 = vld [vmem:[%s87 + $0x20] sm:$0xff]
      %v2048 = vld [vmem:[%s87 + $0x28] sm:$0xff]
      %v2049 = vld [vmem:[%s87 + $0x30] sm:$0xff]
      %v2050 = vld [vmem:[%s87 + $0x38] sm:$0xff]
      %v2051 = vld [vmem:[%s2] sm:$0xf]
      %v2053 = vlaneseq
      %v2054 = vshrl.u32 %v2053, 7
      %v2055 = vsub.s32 0, %v2054
      %v2056 = vrot.slane %v2051, %v2055
      %v2057 = vlaneseq
      %v2058 = vshrl.u32 %v2057, 7
      %v2059 = vsub.s32 1, %v2058
      %v2060 = vrot.slane %v2051, %v2059
      %v2061 = vlaneseq
      %v2062 = vshrl.u32 %v2061, 7
      %v2063 = vsub.s32 2, %v2062
      %v2064 = vrot.slane %v2051, %v2063
      %v2065 = vlaneseq
      %v2066 = vshrl.u32 %v2065, 7
      %v2067 = vsub.s32 3, %v2066
      %v2068 = vrot.slane %v2051, %v2067
      %v2073 = vadd.f32 %v2043, %v2056
      %v2074 = vadd.f32 %v2044, %v2060
      %v2075 = vadd.f32 %v2045, %v2064
      %v2076 = vadd.f32 %v2046, %v2068
      %v2077 = vadd.f32 %v2047, %v2056
      %v2078 = vadd.f32 %v2048, %v2060
      %v2079 = vadd.f32 %v2049, %v2064
      %v2080 = vadd.f32 %v2050, %v2068
      %v2081 = vmax.f32 %v2073, 0.0
      %v2082 = vmax.f32 %v2074, 0.0
      %v2083 = vmax.f32 %v2075, 0.0
      %v2084 = vmax.f32 %v2076, 0.0
      %v2085 = vmax.f32 %v2077, 0.0
      %v2086 = vmax.f32 %v2078, 0.0
      %v2087 = vmax.f32 %v2079, 0.0
      %v2088 = vmax.f32 %v2080, 0.0
      %v2089 = vpack.c.bf16 %v2085, %v2081
      %v2090 = vpack.c.bf16 %v2086, %v2082
      %v2091 = vpack.c.bf16 %v2087, %v2083
      %v2092 = vpack.c.bf16 %v2088, %v2084
      %v2093 = vld [vmem:[#allocation8] sm:$0xf]
      %v2094 = vld [vmem:[#allocation8 + $0x4] sm:$0xf]
      %v2095 = vld [vmem:[#allocation8 + $0x8] sm:$0xf]
      %v2096 = vld [vmem:[#allocation8 + $0xc] sm:$0xf]
      %v2097 = vld [vmem:[#allocation8 + $0x10] sm:$0xf]
      %v2098 = vld [vmem:[#allocation8 + $0x14] sm:$0xf]
      %v2099 = vld [vmem:[#allocation8 + $0x18] sm:$0xf]
      %v2100 = vld [vmem:[#allocation8 + $0x1c] sm:$0xf]
      %v2101 = vld [vmem:[#allocation8 + $0x20] sm:$0xf]
      %v2102 = vld [vmem:[#allocation8 + $0x24] sm:$0xf]
      %v2103 = vld [vmem:[#allocation8 + $0x28] sm:$0xf]
      %v2104 = vld [vmem:[#allocation8 + $0x2c] sm:$0xf]
      %v2105 = vld [vmem:[#allocation8 + $0x30] sm:$0xf]
      %v2106 = vld [vmem:[#allocation8 + $0x34] sm:$0xf]
      %v2107 = vld [vmem:[#allocation8 + $0x38] sm:$0xf]
      %v2108 = vld [vmem:[#allocation8 + $0x3c] sm:$0xf]
      %v2109 = vld [vmem:[#allocation8 + $0x40] sm:$0xf]
      %v2110 = vld [vmem:[#allocation8 + $0x44] sm:$0xf]
      %v2111 = vld [vmem:[#allocation8 + $0x48] sm:$0xf]
      %v2112 = vld [vmem:[#allocation8 + $0x4c] sm:$0xf]
      %v2113 = vld [vmem:[#allocation8 + $0x50] sm:$0xf]
      %v2114 = vld [vmem:[#allocation8 + $0x54] sm:$0xf]
      %v2115 = vld [vmem:[#allocation8 + $0x58] sm:$0xf]
      %v2116 = vld [vmem:[#allocation8 + $0x5c] sm:$0xf]
      %v2117 = vld [vmem:[#allocation8 + $0x60] sm:$0xf]
      %v2118 = vld [vmem:[#allocation8 + $0x64] sm:$0xf]
      %v2119 = vld [vmem:[#allocation8 + $0x68] sm:$0xf]
      %v2120 = vld [vmem:[#allocation8 + $0x6c] sm:$0xf]
      %v2121 = vld [vmem:[#allocation8 + $0x70] sm:$0xf]
      %v2122 = vld [vmem:[#allocation8 + $0x74] sm:$0xf]
      %v2123 = vld [vmem:[#allocation8 + $0x78] sm:$0xf]
      %v2124 = vld [vmem:[#allocation8 + $0x7c] sm:$0xf]
      %v2125 = vld [vmem:[#allocation8 + $0x80] sm:$0xf]
      %v2126 = vld [vmem:[#allocation8 + $0x84] sm:$0xf]
      %v2127 = vld [vmem:[#allocation8 + $0x88] sm:$0xf]
      %v2128 = vld [vmem:[#allocation8 + $0x8c] sm:$0xf]
      %v2129 = vld [vmem:[#allocation8 + $0x90] sm:$0xf]
      %v2130 = vld [vmem:[#allocation8 + $0x94] sm:$0xf]
      %v2131 = vld [vmem:[#allocation8 + $0x98] sm:$0xf]
      %v2132 = vld [vmem:[#allocation8 + $0x9c] sm:$0xf]
      %v2133 = vld [vmem:[#allocation8 + $0xa0] sm:$0xf]
      %v2134 = vld [vmem:[#allocation8 + $0xa4] sm:$0xf]
      %v2135 = vld [vmem:[#allocation8 + $0xa8] sm:$0xf]
      %v2136 = vld [vmem:[#allocation8 + $0xac] sm:$0xf]
      %v2137 = vld [vmem:[#allocation8 + $0xb0] sm:$0xf]
      %v2138 = vld [vmem:[#allocation8 + $0xb4] sm:$0xf]
      %v2139 = vld [vmem:[#allocation8 + $0xb8] sm:$0xf]
      %v2140 = vld [vmem:[#allocation8 + $0xbc] sm:$0xf]
      %v2141 = vld [vmem:[#allocation8 + $0xc0] sm:$0xf]
      %v2142 = vld [vmem:[#allocation8 + $0xc4] sm:$0xf]
      %v2143 = vld [vmem:[#allocation8 + $0xc8] sm:$0xf]
      %v2144 = vld [vmem:[#allocation8 + $0xcc] sm:$0xf]
      %v2145 = vld [vmem:[#allocation8 + $0xd0] sm:$0xf]
      %v2146 = vld [vmem:[#allocation8 + $0xd4] sm:$0xf]
      %v2147 = vld [vmem:[#allocation8 + $0xd8] sm:$0xf]
      %v2148 = vld [vmem:[#allocation8 + $0xdc] sm:$0xf]
      %v2149 = vld [vmem:[#allocation8 + $0xe0] sm:$0xf]
      %v2150 = vld [vmem:[#allocation8 + $0xe4] sm:$0xf]
      %v2151 = vld [vmem:[#allocation8 + $0xe8] sm:$0xf]
      %v2152 = vld [vmem:[#allocation8 + $0xec] sm:$0xf]
      %v2153 = vld [vmem:[#allocation8 + $0xf0] sm:$0xf]
      %v2154 = vld [vmem:[#allocation8 + $0xf4] sm:$0xf]
      %v2155 = vld [vmem:[#allocation8 + $0xf8] sm:$0xf]
      %v2156 = vld [vmem:[#allocation8 + $0xfc] sm:$0xf]
      %v2157 = vld [vmem:[%s4] sm:$0x1]
      %v2159 = vlaneseq
      %v2160 = vshrl.u32 %v2159, 7
      %v2161 = vsub.s32 0, %v2160
      %v2162 = vrot.slane %v2157, %v2161
      %v2228 = vunpack.c.l.b16 %v2093
      %v2229 = vunpack.c.l.b16 %v2094
      %v2230 = vunpack.c.l.b16 %v2095
      %v2231 = vunpack.c.l.b16 %v2096
      %v2232 = vunpack.c.l.b16 %v2097
      %v2233 = vunpack.c.l.b16 %v2098
      %v2234 = vunpack.c.l.b16 %v2099
      %v2235 = vunpack.c.l.b16 %v2100
      %v2236 = vunpack.c.l.b16 %v2101
      %v2237 = vunpack.c.l.b16 %v2102
      %v2238 = vunpack.c.l.b16 %v2103
      %v2239 = vunpack.c.l.b16 %v2104
      %v2240 = vunpack.c.l.b16 %v2105
      %v2241 = vunpack.c.l.b16 %v2106
      %v2242 = vunpack.c.l.b16 %v2107
      %v2243 = vunpack.c.l.b16 %v2108
      %v2244 = vunpack.c.l.b16 %v2109
      %v2245 = vunpack.c.l.b16 %v2110
      %v2246 = vunpack.c.l.b16 %v2111
      %v2247 = vunpack.c.l.b16 %v2112
      %v2248 = vunpack.c.l.b16 %v2113
      %v2249 = vunpack.c.l.b16 %v2114
      %v2250 = vunpack.c.l.b16 %v2115
      %v2251 = vunpack.c.l.b16 %v2116
      %v2252 = vunpack.c.l.b16 %v2117
      %v2253 = vunpack.c.l.b16 %v2118
      %v2254 = vunpack.c.l.b16 %v2119
      %v2255 = vunpack.c.l.b16 %v2120
      %v2256 = vunpack.c.l.b16 %v2121
      %v2257 = vunpack.c.l.b16 %v2122
      %v2258 = vunpack.c.l.b16 %v2123
      %v2259 = vunpack.c.l.b16 %v2124
      %v2260 = vunpack.c.l.b16 %v2125
      %v2261 = vunpack.c.l.b16 %v2126
      %v2262 = vunpack.c.l.b16 %v2127
      %v2263 = vunpack.c.l.b16 %v2128
      %v2264 = vunpack.c.l.b16 %v2129
      %v2265 = vunpack.c.l.b16 %v2130
      %v2266 = vunpack.c.l.b16 %v2131
      %v2267 = vunpack.c.l.b16 %v2132
      %v2268 = vunpack.c.l.b16 %v2133
      %v2269 = vunpack.c.l.b16 %v2134
      %v2270 = vunpack.c.l.b16 %v2135
      %v2271 = vunpack.c.l.b16 %v2136
      %v2272 = vunpack.c.l.b16 %v2137
      %v2273 = vunpack.c.l.b16 %v2138
      %v2274 = vunpack.c.l.b16 %v2139
      %v2275 = vunpack.c.l.b16 %v2140
      %v2276 = vunpack.c.l.b16 %v2141
      %v2277 = vunpack.c.l.b16 %v2142
      %v2278 = vunpack.c.l.b16 %v2143
      %v2279 = vunpack.c.l.b16 %v2144
      %v2280 = vunpack.c.l.b16 %v2145
      %v2281 = vunpack.c.l.b16 %v2146
      %v2282 = vunpack.c.l.b16 %v2147
      %v2283 = vunpack.c.l.b16 %v2148
      %v2284 = vunpack.c.l.b16 %v2149
      %v2285 = vunpack.c.l.b16 %v2150
      %v2286 = vunpack.c.l.b16 %v2151
      %v2287 = vunpack.c.l.b16 %v2152
      %v2288 = vunpack.c.l.b16 %v2153
      %v2289 = vunpack.c.l.b16 %v2154
      %v2290 = vunpack.c.l.b16 %v2155
      %v2291 = vunpack.c.l.b16 %v2156
      %v2292 = vpack.c.b16 %v2229, %v2228
      %v2293 = vpack.c.b16 %v2231, %v2230
      %v2294 = vpack.c.b16 %v2233, %v2232
      %v2295 = vpack.c.b16 %v2235, %v2234
      %v2296 = vpack.c.b16 %v2237, %v2236
      %v2297 = vpack.c.b16 %v2239, %v2238
      %v2298 = vpack.c.b16 %v2241, %v2240
      %v2299 = vpack.c.b16 %v2243, %v2242
      %v2300 = vpack.c.b16 %v2245, %v2244
      %v2301 = vpack.c.b16 %v2247, %v2246
      %v2302 = vpack.c.b16 %v2249, %v2248
      %v2303 = vpack.c.b16 %v2251, %v2250
      %v2304 = vpack.c.b16 %v2253, %v2252
      %v2305 = vpack.c.b16 %v2255, %v2254
      %v2306 = vpack.c.b16 %v2257, %v2256
      %v2307 = vpack.c.b16 %v2259, %v2258
      %v2308 = vpack.c.b16 %v2261, %v2260
      %v2309 = vpack.c.b16 %v2263, %v2262
      %v2310 = vpack.c.b16 %v2265, %v2264
      %v2311 = vpack.c.b16 %v2267, %v2266
      %v2312 = vpack.c.b16 %v2269, %v2268
      %v2313 = vpack.c.b16 %v2271, %v2270
      %v2314 = vpack.c.b16 %v2273, %v2272
      %v2315 = vpack.c.b16 %v2275, %v2274
      %v2316 = vpack.c.b16 %v2277, %v2276
      %v2317 = vpack.c.b16 %v2279, %v2278
      %v2318 = vpack.c.b16 %v2281, %v2280
      %v2319 = vpack.c.b16 %v2283, %v2282
      %v2320 = vpack.c.b16 %v2285, %v2284
      %v2321 = vpack.c.b16 %v2287, %v2286
      %v2322 = vpack.c.b16 %v2289, %v2288
      %v2323 = vpack.c.b16 %v2291, %v2290
      %2356 = vmatprep.subr.bf16.mxu0 0
      %2357 = vmatpush1.bf16.msra.mxu0 %v2292
      %2358 = vmatprep.subr.bf16.mxu0 0
      %2359 = vmatpush1.bf16.msra.mxu0 %v2293
      %2360 = vmatprep.subr.bf16.mxu0 0
      %2361 = vmatpush1.bf16.msra.mxu0 %v2294
      %2362 = vmatprep.subr.bf16.mxu0 0
      %2363 = vmatpush1.bf16.msra.mxu0 %v2295
      %2364 = vmatprep.subr.bf16.mxu0 0
      %2365 = vmatpush1.bf16.msra.mxu0 %v2296
      %2366 = vmatprep.subr.bf16.mxu0 0
      %2367 = vmatpush1.bf16.msra.mxu0 %v2297
      %2368 = vmatprep.subr.bf16.mxu0 0
      %2369 = vmatpush1.bf16.msra.mxu0 %v2298
      %2370 = vmatprep.subr.bf16.mxu0 0
      %2371 = vmatpush1.bf16.msra.mxu0 %v2299
      %2372 = vmatprep.subr.bf16.mxu0 0
      %2373 = vmatpush1.bf16.msra.mxu0 %v2300
      %2374 = vmatprep.subr.bf16.mxu0 0
      %2375 = vmatpush1.bf16.msra.mxu0 %v2301
      %2376 = vmatprep.subr.bf16.mxu0 0
      %2377 = vmatpush1.bf16.msra.mxu0 %v2302
      %2378 = vmatprep.subr.bf16.mxu0 0
      %2379 = vmatpush1.bf16.msra.mxu0 %v2303
      %2380 = vmatprep.subr.bf16.mxu0 0
      %2381 = vmatpush1.bf16.msra.mxu0 %v2304
      %2382 = vmatprep.subr.bf16.mxu0 0
      %2383 = vmatpush1.bf16.msra.mxu0 %v2305
      %2384 = vmatprep.subr.bf16.mxu0 0
      %2385 = vmatpush1.bf16.msra.mxu0 %v2306
      %2386 = vmatprep.subr.bf16.mxu0 0
      %2387 = vmatpush1.bf16.msra.mxu0 %v2307
      %2388 = vmatprep.mubr.bf16.mxu0 %v2090
      %2389 = vmatmul.mubr.bf16.gmra.mrb[0].mxu0 %v2089
      %v2390 = vpop.f32.mrb[0].mxu0
      %v2391 = vadd.f32 %v2162, %v2390
      %v2392 = vpop.f32.mrb[0].mxu0
      %v2393 = vpop.f32.mrb[0].mxu0
      %v2394 = vadd.f32 %v2162, %v2393
      %v2395 = vpop.f32.mrb[0].mxu0
      %2396 = vdwg.mxu0
      %2397 = vmatprep.subr.bf16.mxu0 0
      %2398 = vmatpush1.bf16.msra.mxu0 %v2308
      %2399 = vmatprep.subr.bf16.mxu0 0
      %2400 = vmatpush1.bf16.msra.mxu0 %v2309
      %2401 = vmatprep.subr.bf16.mxu0 0
      %2402 = vmatpush1.bf16.msra.mxu0 %v2310
      %2403 = vmatprep.subr.bf16.mxu0 0
      %2404 = vmatpush1.bf16.msra.mxu0 %v2311
      %2405 = vmatprep.subr.bf16.mxu0 0
      %2406 = vmatpush1.bf16.msra.mxu0 %v2312
      %2407 = vmatprep.subr.bf16.mxu0 0
      %2408 = vmatpush1.bf16.msra.mxu0 %v2313
      %2409 = vmatprep.subr.bf16.mxu0 0
      %2410 = vmatpush1.bf16.msra.mxu0 %v2314
      %2411 = vmatprep.subr.bf16.mxu0 0
      %2412 = vmatpush1.bf16.msra.mxu0 %v2315
      %2413 = vmatprep.subr.bf16.mxu0 0
      %2414 = vmatpush1.bf16.msra.mxu0 %v2316
      %2415 = vmatprep.subr.bf16.mxu0 0
      %2416 = vmatpush1.bf16.msra.mxu0 %v2317
      %2417 = vmatprep.subr.bf16.mxu0 0
      %2418 = vmatpush1.bf16.msra.mxu0 %v2318
      %2419 = vmatprep.subr.bf16.mxu0 0
      %2420 = vmatpush1.bf16.msra.mxu0 %v2319
      %2421 = vmatprep.subr.bf16.mxu0 0
      %2422 = vmatpush1.bf16.msra.mxu0 %v2320
      %2423 = vmatprep.subr.bf16.mxu0 0
      %2424 = vmatpush1.bf16.msra.mxu0 %v2321
      %2425 = vmatprep.subr.bf16.mxu0 0
      %2426 = vmatpush1.bf16.msra.mxu0 %v2322
      %2427 = vmatprep.subr.bf16.mxu0 0
      %2428 = vmatpush1.bf16.msra.mxu0 %v2323
      %2429 = vmatprep.mubr.bf16.mxu0 %v2092
      %2430 = vmatmul.mubr.bf16.gmra.mrb[0].mxu0 %v2091
      %v2431 = vpop.f32.mrb[0].mxu0
      %v2432 = vadd.f32 %v2391, %v2431
      %v2433 = vpop.f32.mrb[0].mxu0
      %v2434 = vpop.f32.mrb[0].mxu0
      %v2435 = vadd.f32 %v2394, %v2434
      %v2436 = vpop.f32.mrb[0].mxu0
      %2437 = vdwg.mxu0
      %v2438 = vmax.f32 %v2432, 0.0
      %v2439 = vmax.f32 %v2435, 0.0
      %v2440 = vld [vmem:[%s5] sm:$0x1]
      %v2442 = vlaneseq
      %v2443 = vshrl.u32 %v2442, 7
      %v2444 = vsub.s32 0, %v2443
      %v2445 = vrot.slane %v2440, %v2444
      %v2447 = vmul.f32 %v2438, %v2445
      %v2448 = vmul.f32 %v2439, %v2445
      %2449 = vadd.xlane.f32.xlu0 %v2447
      %v2450 = vpop.xlane.xlu0 %2449
      %2451 = vadd.xlane.f32.xlu0 %v2448
      %v2452 = vpop.xlane.xlu0 %2451
      %v2453 = vld [vmem:[#allocation3] sm:$0x1]
      %v2455 = vlaneseq
      %v2456 = vshrl.u32 %v2455, 7
      %v2457 = vsub.s32 0, %v2456
      %v2458 = vrot.slane %v2453, %v2457
      %v2460 = vadd.f32 %v2450, %v2458
      %v2461 = vadd.f32 %v2452, %v2458
      %s2462 = smul.u32 0, 16
      %s2463 = scalar_lea.vmem %s7, %s2462
      %vm2464 = vcmask 7168
      %2465 = vst.msk [vmem:[%s2463] sm:$0xff] %vm2464, %v2460
      %2466 = vst.msk [vmem:[%s2463 + $0x8] sm:$0xff] %vm2464, %v2461
    $region49: #{tpu_custom_call.1} parent=1 // pred_fallthru
      _
    // Predicated region
    $region50: #{tpu_custom_call.1} parent=1 // pred_check
      _
    $region51: #{tpu_custom_call.1} parent=1 // pred_check_branch
      %2468 = sbr.rel (0) target = $region53
    $region52: #{tpu_custom_call.1} parent=1 // pred_region
      _
    $region53: #{tpu_custom_call.1} parent=1 // pred_fallthru
      _
    // Predicated region
    $region54: #{tpu_custom_call.1} parent=1 // pred_check
      _
    $region55: #{tpu_custom_call.1} parent=1 // pred_check_branch
      %2470 = sbr.rel (0) target = $region57
    $region56: #{tpu_custom_call.1} parent=1 // pred_region
      _
    $region57: #{tpu_custom_call.1} parent=1 // pred_fallthru
      _
    %2471 = vsyncpa [#allocation5], 1
    %2472 = vsyncpa [#allocation7], 1

</llo_original>
